<compile_context>
chip_gen: v6e
topology: v6e:2x2x1
jax: 0.10.0
libtpu: 0.0.40
codegen_flags: <defaults>
</compile_context>

<pallas_src>
import functools

import jax
import jax.numpy as jnp
import numpy as np
from jax.experimental import pallas as pl
from jax.experimental.pallas import tpu as pltpu


def _lrelu(v, slope=0.5):
    # LeakyReLU with 0 < slope < 1:  max(v, slope*v)  (pure VALU, no select).
    return jnp.maximum(v, slope * v)


def _couple_kernel(*refs, n_layers):
    """refs = (xm, xn, [sw_i, sb_i, tw_i, tb_i] * n_layers, out_n)."""
    xm_ref, xn_ref = refs[0], refs[1]
    p = refs[2:2 + 4 * n_layers]
    on_ref = refs[2 + 4 * n_layers]

    x = xm_ref[...]
    hs = x
    ht = x
    for i in range(n_layers):
        sw, sb, tw, tb = p[4 * i], p[4 * i + 1], p[4 * i + 2], p[4 * i + 3]
        hs = jnp.dot(hs, sw[...], preferred_element_type=jnp.float32) + sb[...]
        ht = jnp.dot(ht, tw[...], preferred_element_type=jnp.float32) + tb[...]
        if i < n_layers - 1:          # hidden layers
            hs = jnp.tanh(hs)         # S activation (only on the S tile)
            ht = _lrelu(ht)           # T activation (only on the T tile)
    s = hs                            # S has no final activation
    t = jnp.tanh(ht)                  # T has a final Tanh

    # coupling: key=0, reverse=False, invert=False
    # TODO(synk): key=1 / reverse=True / invert=True branches only swap which
    # input feeds S/T and flip the sign / inversion of exp(); trivial variants.
    on_ref[...] = xn_ref[...] * jnp.exp(s) + t


def _pick_batch_tile(B, block_b):
    """Batch tile: a multiple of 128, as large as block_b allows, but small enough
    that the grid has >= 2 steps (so v7x's two TensorCores both get work)."""
    if B <= 128:
        return B
    tb = min(block_b, (B // 2) // 128 * 128)
    return max(128, tb)


def couple_layer_forward(input_M, input_N, params_flat, *, block_b=1024):
    """params_flat: [sw0, sb0, tw0, tb0, sw1, ...]; weights (in, out), biases (1, out)."""
    B, M = input_M.shape
    _, N = input_N.shape
    n_layers = len(params_flat) // 4

    TB = _pick_batch_tile(B, block_b)
    grid = (pl.cdiv(B, TB),)
    # If B is not a multiple of TB, the padded tail rows flow through exp()/tanh()
    # on undefined data; those rows are never written back, so this is benign.

    in_specs = [
        pl.BlockSpec((TB, M), lambda i: (i, 0)),   # input_M batch tile
        pl.BlockSpec((TB, N), lambda i: (i, 0)),   # input_N batch tile
    ]
    # Weights / biases are resident in VMEM (same block every grid step).
    in_specs += [pl.BlockSpec(prm.shape, lambda i: (0, 0)) for prm in params_flat]

    # VMEM budget: double-buffered batch tiles + double-buffered resident params
    # + headroom for Mosaic internal scratch (never request the whole v7x VMEM).
    tile_bytes = TB * (M + 2 * N) * 4
    param_bytes = sum(int(np.prod(prm.shape)) * 4 for prm in params_flat)
    vmem_limit = int(min(64 << 20, 2 * tile_bytes + 2 * param_bytes + (8 << 20)))

    out_N = pl.pallas_call(
        functools.partial(_couple_kernel, n_layers=n_layers),
        out_shape=jax.ShapeDtypeStruct((B, N), input_N.dtype),
        grid=grid,
        in_specs=in_specs,
        out_specs=pl.BlockSpec((TB, N), lambda i: (i, 0)),
        compiler_params=pltpu.CompilerParams(
            dimension_semantics=("parallel",),     # shard batch across TCs (v7x)
            vmem_limit_bytes=vmem_limit,
        ),
    )(input_M, input_N, *params_flat)

    # output_M == input_M: identity, never touches the kernel (no extra HBM write).
    return input_M, out_N


def xavier_uniform(key, fan_in, fan_out):
    bound = float(np.sqrt(6.0 / (fan_in + fan_out)))
    return jax.random.uniform(key, (fan_in, fan_out), jnp.float32, -bound, bound)


def make_params(key, M, N, fn):
    """S/T weights as (in, out), biases as (1, out).  (The torch module zeroes the
    biases; small random biases are used here so the kernel's bias path is tested.)"""
    dims = [M] + list(fn) + [N]
    params = []
    for i in range(len(dims) - 1):
        key, ks, kt, kbs, kbt = jax.random.split(key, 5)
        di, do = dims[i], dims[i + 1]
        params += [
            xavier_uniform(ks, di, do),
            0.05 * jax.random.normal(kbs, (1, do), jnp.float32),
            xavier_uniform(kt, di, do),
            0.05 * jax.random.normal(kbt, (1, do), jnp.float32),
        ]
    return params


def reference_forward(input_M, input_N, params_flat):
    """Pure-JAX reference of the same forward (key=0, reverse=False, invert=False)."""
    n_layers = len(params_flat) // 4
    hs = ht = input_M
    for i in range(n_layers):
        sw, sb, tw, tb = params_flat[4 * i:4 * i + 4]
        hs = hs @ sw + sb
        ht = ht @ tw + tb
        if i < n_layers - 1:
            hs = jnp.tanh(hs)
            ht = _lrelu(ht)
    return input_M, input_N * jnp.exp(hs) + jnp.tanh(ht)


if __name__ == "__main__":
    M, N = 16, 16
    fn = (32, 64)

    key = jax.random.PRNGKey(0)
    k_p, key = jax.random.split(key)
    params = make_params(k_p, M, N, fn)

    # B=256: clean 2-step parallel grid (TB=128).  B=200: ragged tail block.
    for B in (256, 200):
        key, k_m, k_n = jax.random.split(key, 3)
        input_M = jax.random.normal(k_m, (B, M), jnp.float32)
        input_N = jax.random.normal(k_n, (B, N), jnp.float32)

        ref_M, ref_N = reference_forward(input_M, input_N, params)
        out_M, out_N = couple_layer_forward(input_M, input_N, params)
        jax.block_until_ready(out_N)

        np.testing.assert_allclose(np.asarray(out_M), np.asarray(ref_M),
                                   rtol=1e-5, atol=1e-5)
        np.testing.assert_allclose(np.asarray(out_N), np.asarray(ref_N),
                                   rtol=1e-5, atol=1e-5)

    print("KERNEL_OK")
</pallas_src>

<mosaic_0001>
module attributes {stable_mosaic.version = 11 : i64} {
  func.func @_couple_kernel(%arg0: i32, %arg1: memref<128x16xf32, #tpu.memory_space<vmem>>, %arg2: memref<128x16xf32, #tpu.memory_space<vmem>>, %arg3: memref<16x32xf32, #tpu.memory_space<vmem>>, %arg4: memref<1x32xf32, #tpu.memory_space<vmem>>, %arg5: memref<16x32xf32, #tpu.memory_space<vmem>>, %arg6: memref<1x32xf32, #tpu.memory_space<vmem>>, %arg7: memref<32x64xf32, #tpu.memory_space<vmem>>, %arg8: memref<1x64xf32, #tpu.memory_space<vmem>>, %arg9: memref<32x64xf32, #tpu.memory_space<vmem>>, %arg10: memref<1x64xf32, #tpu.memory_space<vmem>>, %arg11: memref<64x16xf32, #tpu.memory_space<vmem>>, %arg12: memref<1x16xf32, #tpu.memory_space<vmem>>, %arg13: memref<64x16xf32, #tpu.memory_space<vmem>>, %arg14: memref<1x16xf32, #tpu.memory_space<vmem>>, %arg15: memref<128x16xf32, #tpu.memory_space<vmem>>) attributes {dimension_semantics = [#tpu.dimension_semantics<parallel>], iteration_bounds = array<i64: 2>, scalar_prefetch = 0 : i64, scratch_operands = 0 : i64, tpu.core_type = #tpu.core_type<tc>, window_params = [{transform_indices = @transform_0, window_bounds = array<i64: 128, 16>}, {transform_indices = @transform_1, window_bounds = array<i64: 128, 16>}, {pipeline_mode = #tpu.pipeline_mode<synchronous>, transform_indices = @transform_2, window_bounds = array<i64: 16, 32>}, {pipeline_mode = #tpu.pipeline_mode<synchronous>, transform_indices = @transform_3, window_bounds = array<i64: 1, 32>}, {pipeline_mode = #tpu.pipeline_mode<synchronous>, transform_indices = @transform_4, window_bounds = array<i64: 16, 32>}, {pipeline_mode = #tpu.pipeline_mode<synchronous>, transform_indices = @transform_5, window_bounds = array<i64: 1, 32>}, {pipeline_mode = #tpu.pipeline_mode<synchronous>, transform_indices = @transform_6, window_bounds = array<i64: 32, 64>}, {pipeline_mode = #tpu.pipeline_mode<synchronous>, transform_indices = @transform_7, window_bounds = array<i64: 1, 64>}, {pipeline_mode = #tpu.pipeline_mode<synchronous>, transform_indices = @transform_8, window_bounds = array<i64: 32, 64>}, {pipeline_mode = #tpu.pipeline_mode<synchronous>, transform_indices = @transform_9, window_bounds = array<i64: 1, 64>}, {pipeline_mode = #tpu.pipeline_mode<synchronous>, transform_indices = @transform_10, window_bounds = array<i64: 64, 16>}, {pipeline_mode = #tpu.pipeline_mode<synchronous>, transform_indices = @transform_11, window_bounds = array<i64: 1, 16>}, {pipeline_mode = #tpu.pipeline_mode<synchronous>, transform_indices = @transform_12, window_bounds = array<i64: 64, 16>}, {pipeline_mode = #tpu.pipeline_mode<synchronous>, transform_indices = @transform_13, window_bounds = array<i64: 1, 16>}, {transform_indices = @transform_14, window_bounds = array<i64: 128, 16>}]} {
    %c0 = arith.constant 0 : index
    %c0_0 = arith.constant 0 : index
    %0 = vector.load %arg1[%c0, %c0_0] : memref<128x16xf32, #tpu.memory_space<vmem>>, vector<128x16xf32>
    %c0_1 = arith.constant 0 : index
    %c0_2 = arith.constant 0 : index
    %1 = vector.load %arg3[%c0_1, %c0_2] : memref<16x32xf32, #tpu.memory_space<vmem>>, vector<16x32xf32>
    %cst = arith.constant dense<0.000000e+00> : vector<128x32xf32>
    %2 = tpu.matmul %0, %1, %cst {dimension_numbers = #tpu.dot_dimension_numbers<[1], [0], [0], [1], [0, 0, 1, 1], [], []>} : vector<128x16xf32>, vector<16x32xf32>, vector<128x32xf32> -> vector<128x32xf32>
    %c0_3 = arith.constant 0 : index
    %c0_4 = arith.constant 0 : index
    %3 = vector.load %arg4[%c0_3, %c0_4] : memref<1x32xf32, #tpu.memory_space<vmem>>, vector<1x32xf32>
    %4 = vector.broadcast %3 : vector<1x32xf32> to vector<128x32xf32>
    %5 = arith.addf %2, %4 : vector<128x32xf32>
    %c0_5 = arith.constant 0 : index
    %c0_6 = arith.constant 0 : index
    %6 = vector.load %arg5[%c0_5, %c0_6] : memref<16x32xf32, #tpu.memory_space<vmem>>, vector<16x32xf32>
    %cst_7 = arith.constant dense<0.000000e+00> : vector<128x32xf32>
    %7 = tpu.matmul %0, %6, %cst_7 {dimension_numbers = #tpu.dot_dimension_numbers<[1], [0], [0], [1], [0, 0, 1, 1], [], []>} : vector<128x16xf32>, vector<16x32xf32>, vector<128x32xf32> -> vector<128x32xf32>
    %c0_8 = arith.constant 0 : index
    %c0_9 = arith.constant 0 : index
    %8 = vector.load %arg6[%c0_8, %c0_9] : memref<1x32xf32, #tpu.memory_space<vmem>>, vector<1x32xf32>
    %9 = vector.broadcast %8 : vector<1x32xf32> to vector<128x32xf32>
    %10 = arith.addf %7, %9 : vector<128x32xf32>
    %11 = math.tanh %5 : vector<128x32xf32>
    %cst_10 = arith.constant 5.000000e-01 : f32
    %12 = vector.broadcast %cst_10 : f32 to vector<128x32xf32>
    %13 = arith.mulf %12, %10 : vector<128x32xf32>
    %14 = arith.maximumf %10, %13 : vector<128x32xf32>
    %c0_11 = arith.constant 0 : index
    %c0_12 = arith.constant 0 : index
    %15 = vector.load %arg7[%c0_11, %c0_12] : memref<32x64xf32, #tpu.memory_space<vmem>>, vector<32x64xf32>
    %cst_13 = arith.constant dense<0.000000e+00> : vector<128x64xf32>
    %16 = tpu.matmul %11, %15, %cst_13 {dimension_numbers = #tpu.dot_dimension_numbers<[1], [0], [0], [1], [0, 0, 1, 1], [], []>} : vector<128x32xf32>, vector<32x64xf32>, vector<128x64xf32> -> vector<128x64xf32>
    %c0_14 = arith.constant 0 : index
    %c0_15 = arith.constant 0 : index
    %17 = vector.load %arg8[%c0_14, %c0_15] : memref<1x64xf32, #tpu.memory_space<vmem>>, vector<1x64xf32>
    %18 = vector.broadcast %17 : vector<1x64xf32> to vector<128x64xf32>
    %19 = arith.addf %16, %18 : vector<128x64xf32>
    %c0_16 = arith.constant 0 : index
    %c0_17 = arith.constant 0 : index
    %20 = vector.load %arg9[%c0_16, %c0_17] : memref<32x64xf32, #tpu.memory_space<vmem>>, vector<32x64xf32>
    %cst_18 = arith.constant dense<0.000000e+00> : vector<128x64xf32>
    %21 = tpu.matmul %14, %20, %cst_18 {dimension_numbers = #tpu.dot_dimension_numbers<[1], [0], [0], [1], [0, 0, 1, 1], [], []>} : vector<128x32xf32>, vector<32x64xf32>, vector<128x64xf32> -> vector<128x64xf32>
    %c0_19 = arith.constant 0 : index
    %c0_20 = arith.constant 0 : index
    %22 = vector.load %arg10[%c0_19, %c0_20] : memref<1x64xf32, #tpu.memory_space<vmem>>, vector<1x64xf32>
    %23 = vector.broadcast %22 : vector<1x64xf32> to vector<128x64xf32>
    %24 = arith.addf %21, %23 : vector<128x64xf32>
    %25 = math.tanh %19 : vector<128x64xf32>
    %cst_21 = arith.constant 5.000000e-01 : f32
    %26 = vector.broadcast %cst_21 : f32 to vector<128x64xf32>
    %27 = arith.mulf %26, %24 : vector<128x64xf32>
    %28 = arith.maximumf %24, %27 : vector<128x64xf32>
    %c0_22 = arith.constant 0 : index
    %c0_23 = arith.constant 0 : index
    %29 = vector.load %arg11[%c0_22, %c0_23] : memref<64x16xf32, #tpu.memory_space<vmem>>, vector<64x16xf32>
    %cst_24 = arith.constant dense<0.000000e+00> : vector<128x16xf32>
    %30 = tpu.matmul %25, %29, %cst_24 {dimension_numbers = #tpu.dot_dimension_numbers<[1], [0], [0], [1], [0, 0, 1, 1], [], []>} : vector<128x64xf32>, vector<64x16xf32>, vector<128x16xf32> -> vector<128x16xf32>
    %c0_25 = arith.constant 0 : index
    %c0_26 = arith.constant 0 : index
    %31 = vector.load %arg12[%c0_25, %c0_26] : memref<1x16xf32, #tpu.memory_space<vmem>>, vector<1x16xf32>
    %32 = vector.broadcast %31 : vector<1x16xf32> to vector<128x16xf32>
    %33 = arith.addf %30, %32 : vector<128x16xf32>
    %c0_27 = arith.constant 0 : index
    %c0_28 = arith.constant 0 : index
    %34 = vector.load %arg13[%c0_27, %c0_28] : memref<64x16xf32, #tpu.memory_space<vmem>>, vector<64x16xf32>
    %cst_29 = arith.constant dense<0.000000e+00> : vector<128x16xf32>
    %35 = tpu.matmul %28, %34, %cst_29 {dimension_numbers = #tpu.dot_dimension_numbers<[1], [0], [0], [1], [0, 0, 1, 1], [], []>} : vector<128x64xf32>, vector<64x16xf32>, vector<128x16xf32> -> vector<128x16xf32>
    %c0_30 = arith.constant 0 : index
    %c0_31 = arith.constant 0 : index
    %36 = vector.load %arg14[%c0_30, %c0_31] : memref<1x16xf32, #tpu.memory_space<vmem>>, vector<1x16xf32>
    %37 = vector.broadcast %36 : vector<1x16xf32> to vector<128x16xf32>
    %38 = arith.addf %35, %37 : vector<128x16xf32>
    %39 = math.tanh %38 : vector<128x16xf32>
    %c0_32 = arith.constant 0 : index
    %c0_33 = arith.constant 0 : index
    %40 = vector.load %arg2[%c0_32, %c0_33] : memref<128x16xf32, #tpu.memory_space<vmem>>, vector<128x16xf32>
    %41 = math.exp %33 : vector<128x16xf32>
    %42 = arith.mulf %40, %41 : vector<128x16xf32>
    %43 = arith.addf %42, %39 : vector<128x16xf32>
    %c0_34 = arith.constant 0 : index
    %c0_35 = arith.constant 0 : index
    %44 = vector.load %arg15[%c0_34, %c0_35] : memref<128x16xf32, #tpu.memory_space<vmem>>, vector<128x16xf32>
    tpu.vector_store %arg15[%c0_34, %c0_35], %43 {strides = array<i32>} : memref<128x16xf32, #tpu.memory_space<vmem>>, vector<128x16xf32>,
    return
  }
  func.func @transform_0(%arg0: i32) -> (i32, i32) {
    %c0_i32 = arith.constant 0 : i32
    %c0_i32_0 = arith.constant 0 : i32
    return %arg0, %c0_i32 : i32, i32
  }
  func.func @transform_1(%arg0: i32) -> (i32, i32) {
    %c0_i32 = arith.constant 0 : i32
    %c0_i32_0 = arith.constant 0 : i32
    return %arg0, %c0_i32 : i32, i32
  }
  func.func @transform_2(%arg0: i32) -> (i32, i32) {
    %c0_i32 = arith.constant 0 : i32
    %c0_i32_0 = arith.constant 0 : i32
    %c0_i32_1 = arith.constant 0 : i32
    return %c0_i32, %c0_i32_0 : i32, i32
  }
  func.func @transform_3(%arg0: i32) -> (i32, i32) {
    %c0_i32 = arith.constant 0 : i32
    %c0_i32_0 = arith.constant 0 : i32
    %c0_i32_1 = arith.constant 0 : i32
    return %c0_i32, %c0_i32_0 : i32, i32
  }
  func.func @transform_4(%arg0: i32) -> (i32, i32) {
    %c0_i32 = arith.constant 0 : i32
    %c0_i32_0 = arith.constant 0 : i32
    %c0_i32_1 = arith.constant 0 : i32
    return %c0_i32, %c0_i32_0 : i32, i32
  }
  func.func @transform_5(%arg0: i32) -> (i32, i32) {
    %c0_i32 = arith.constant 0 : i32
    %c0_i32_0 = arith.constant 0 : i32
    %c0_i32_1 = arith.constant 0 : i32
    return %c0_i32, %c0_i32_0 : i32, i32
  }
  func.func @transform_6(%arg0: i32) -> (i32, i32) {
    %c0_i32 = arith.constant 0 : i32
    %c0_i32_0 = arith.constant 0 : i32
    %c0_i32_1 = arith.constant 0 : i32
    return %c0_i32, %c0_i32_0 : i32, i32
  }
  func.func @transform_7(%arg0: i32) -> (i32, i32) {
    %c0_i32 = arith.constant 0 : i32
    %c0_i32_0 = arith.constant 0 : i32
    %c0_i32_1 = arith.constant 0 : i32
    return %c0_i32, %c0_i32_0 : i32, i32
  }
  func.func @transform_8(%arg0: i32) -> (i32, i32) {
    %c0_i32 = arith.constant 0 : i32
    %c0_i32_0 = arith.constant 0 : i32
    %c0_i32_1 = arith.constant 0 : i32
    return %c0_i32, %c0_i32_0 : i32, i32
  }
  func.func @transform_9(%arg0: i32) -> (i32, i32) {
    %c0_i32 = arith.constant 0 : i32
    %c0_i32_0 = arith.constant 0 : i32
    %c0_i32_1 = arith.constant 0 : i32
    return %c0_i32, %c0_i32_0 : i32, i32
  }
  func.func @transform_10(%arg0: i32) -> (i32, i32) {
    %c0_i32 = arith.constant 0 : i32
    %c0_i32_0 = arith.constant 0 : i32
    %c0_i32_1 = arith.constant 0 : i32
    return %c0_i32, %c0_i32_0 : i32, i32
  }
  func.func @transform_11(%arg0: i32) -> (i32, i32) {
    %c0_i32 = arith.constant 0 : i32
    %c0_i32_0 = arith.constant 0 : i32
    %c0_i32_1 = arith.constant 0 : i32
    return %c0_i32, %c0_i32_0 : i32, i32
  }
  func.func @transform_12(%arg0: i32) -> (i32, i32) {
    %c0_i32 = arith.constant 0 : i32
    %c0_i32_0 = arith.constant 0 : i32
    %c0_i32_1 = arith.constant 0 : i32
    return %c0_i32, %c0_i32_0 : i32, i32
  }
  func.func @transform_13(%arg0: i32) -> (i32, i32) {
    %c0_i32 = arith.constant 0 : i32
    %c0_i32_0 = arith.constant 0 : i32
    %c0_i32_1 = arith.constant 0 : i32
    return %c0_i32, %c0_i32_0 : i32, i32
  }
  func.func @transform_14(%arg0: i32) -> (i32, i32) {
    %c0_i32 = arith.constant 0 : i32
    %c0_i32_0 = arith.constant 0 : i32
    return %arg0, %c0_i32 : i32, i32
  }
}

</mosaic_0001>

<llo_original>
// kernel: tpu_custom_call.1
$region0: #{tpu_custom_call.1}
  #allocation0 [shape = 'u32[]', space=smem, size = 0x4, offset = 0x4, fixed_abs, tag = 'smem constant byte address 0x4 - core index']
  #allocation1 [shape = 'u32[144,128]{1,0:T(1,128)}', space=vmem, size = 0x12000, scoped, tag = 'internal scratch']
  %s0 = inlined_call_operand.vmem [shape: f32[256,16], index: 0, kind: input, shape index: {}]
  %s1 = inlined_call_operand.vmem [shape: f32[256,16], index: 1, kind: input, shape index: {}]
  %s2 = inlined_call_operand.vmem [shape: f32[16,32], index: 2, kind: input, shape index: {}]
  %s3 = inlined_call_operand.vmem [shape: f32[1,32], index: 3, kind: input, shape index: {}]
  %s4 = inlined_call_operand.vmem [shape: f32[16,32], index: 4, kind: input, shape index: {}]
  %s5 = inlined_call_operand.vmem [shape: f32[1,32], index: 5, kind: input, shape index: {}]
  %s6 = inlined_call_operand.vmem [shape: f32[32,64], index: 6, kind: input, shape index: {}]
  %s7 = inlined_call_operand.vmem [shape: f32[1,64], index: 7, kind: input, shape index: {}]
  %s8 = inlined_call_operand.vmem [shape: f32[32,64], index: 8, kind: input, shape index: {}]
  %s9 = inlined_call_operand.vmem [shape: f32[1,64], index: 9, kind: input, shape index: {}]
  %s10 = inlined_call_operand.vmem [shape: f32[64,16], index: 10, kind: input, shape index: {}]
  %s11 = inlined_call_operand.vmem [shape: f32[1,16], index: 11, kind: input, shape index: {}]
  %s12 = inlined_call_operand.vmem [shape: f32[64,16], index: 12, kind: input, shape index: {}]
  %s13 = inlined_call_operand.vmem [shape: f32[1,16], index: 13, kind: input, shape index: {}]
  %s14 = inlined_call_operand.vmem [shape: f32[256,16], index: 14, kind: output, shape index: {}]
  %s15 = sld [smem:[#allocation0]]
  $region89: #{tpu_custom_call.1} parent=0
    _
  %s17 = ssub.s32 1, %s15
  %s18 = scalar_select 0, %s17, %s15
  loop: start=0, step=1, limit=4
  $region2: #{tpu_custom_call.1} parent=0 // loop_pre_header
    _
  $region3: #{tpu_custom_call.1} parent=0 // loop_header
    %s20 = sphi 0, %s24
    %p21 = scmp.ge.s32.totalorder %s20, 4
    %s30 = sphi 0, %s32
    %s33 = sphi 0, %s30
    %s34 = sphi 0, %s33
    %s50 = sphi 0, %s34
    %s56 = sphi 0, %s58
    %s59 = sphi 0, %s56
    %s60 = sphi 0, %s59
    %s76 = sphi 0, %s60
    %s80 = sphi 0, %s80
    %s82 = sphi 0, %s80
    %s83 = sphi 0, %s82
    %s97 = sphi 0, %s83
    %s101 = sphi 0, %s101
    %s103 = sphi 0, %s101
    %s104 = sphi 0, %s103
    %s118 = sphi 0, %s104
    %s122 = sphi 0, %s122
    %s124 = sphi 0, %s122
    %s125 = sphi 0, %s124
    %s139 = sphi 0, %s125
    %s143 = sphi 0, %s143
    %s145 = sphi 0, %s143
    %s146 = sphi 0, %s145
    %s160 = sphi 0, %s146
    %s164 = sphi 0, %s164
    %s166 = sphi 0, %s164
    %s167 = sphi 0, %s166
    %s181 = sphi 0, %s167
    %s185 = sphi 0, %s185
    %s187 = sphi 0, %s185
    %s188 = sphi 0, %s187
    %s202 = sphi 0, %s188
    %s206 = sphi 0, %s206
    %s208 = sphi 0, %s206
    %s209 = sphi 0, %s208
    %s223 = sphi 0, %s209
    %s227 = sphi 0, %s227
    %s229 = sphi 0, %s227
    %s230 = sphi 0, %s229
    %s244 = sphi 0, %s230
    %s248 = sphi 0, %s248
    %s250 = sphi 0, %s248
    %s251 = sphi 0, %s250
    %s265 = sphi 0, %s251
    %s269 = sphi 0, %s269
    %s271 = sphi 0, %s269
    %s272 = sphi 0, %s271
    %s286 = sphi 0, %s272
    %s290 = sphi 0, %s290
    %s292 = sphi 0, %s290
    %s293 = sphi 0, %s292
    %s307 = sphi 0, %s293
    %s311 = sphi 0, %s311
    %s313 = sphi 0, %s311
    %s314 = sphi 0, %s313
    %s328 = sphi 0, %s314
    %s334 = sphi 0, %s336
    %s337 = sphi 0, %s334
    %s338 = sphi 0, %s337
    %s354 = sphi 0, %s338
  $region4: #{tpu_custom_call.1} parent=0 // loop_header_branch
    %23 = sbr.rel (%p21) target = $region8
  $region5: #{tpu_custom_call.1} parent=0 // loop_body
    %s25 = ssub.s32 %s20, 1
    %s26 = ssub.s32 %s20, 2
    %s27 = sadd.s32 %s20, 1
    %s28 = ssub.s32 %s20, %s27
    %p29 = scmp.eq.s32.totalorder %s28, 0
    %s31 = sadd.s32 %s30, 1
    %s32 = scalar_select %p29, %s30, %s31
    %p35 = pneg %p29
    %p36 = scmp.eq.s32.totalorder %s20, 1
    %p37 = por %p35, %p36
    %p38 = scmp.ne.s32.totalorder %s30, %s33
    %p39 = scmp.eq.s32.totalorder %s20, 0
    %p40 = por %p38, %p39
    %p41 = scmp.ne.s32.totalorder %s30, %s33
    %p42 = scmp.eq.s32.totalorder %s25, 1
    %p43 = por %p41, %p42
    %p44 = scmp.ne.s32.totalorder %s33, %s34
    %p45 = scmp.eq.s32.totalorder %s25, 0
    %p46 = por %p44, %p45
    %p47 = scmp.ne.s32.totalorder %s33, %s34
    %p48 = scmp.eq.s32.totalorder %s26, 1
    %p49 = por %p47, %p48
    %p51 = scmp.ne.s32.totalorder %s34, %s50
    %p52 = scmp.eq.s32.totalorder %s26, 0
    %p53 = por %p51, %p52
    %s54 = ssub.s32 %s20, %s27
    %p55 = scmp.eq.s32.totalorder %s54, 0
    %s57 = sadd.s32 %s56, 1
    %s58 = scalar_select %p55, %s56, %s57
    %p61 = pneg %p55
    %p62 = scmp.eq.s32.totalorder %s20, 1
    %p63 = por %p61, %p62
    %p64 = scmp.ne.s32.totalorder %s56, %s59
    %p65 = scmp.eq.s32.totalorder %s20, 0
    %p66 = por %p64, %p65
    %p67 = scmp.ne.s32.totalorder %s56, %s59
    %p68 = scmp.eq.s32.totalorder %s25, 1
    %p69 = por %p67, %p68
    %p70 = scmp.ne.s32.totalorder %s59, %s60
    %p71 = scmp.eq.s32.totalorder %s25, 0
    %p72 = por %p70, %p71
    %p73 = scmp.ne.s32.totalorder %s59, %s60
    %p74 = scmp.eq.s32.totalorder %s26, 1
    %p75 = por %p73, %p74
    %p77 = scmp.ne.s32.totalorder %s60, %s76
    %p78 = scmp.eq.s32.totalorder %s26, 0
    %p79 = por %p77, %p78
    %s81 = sadd.s32 %s80, 1
    %p84 = scmp.eq.s32.totalorder %s20, 1
    %p85 = scmp.ne.s32.totalorder %s80, %s82
    %p86 = scmp.eq.s32.totalorder %s20, 0
    %p87 = por %p85, %p86
    %p88 = scmp.ne.s32.totalorder %s80, %s82
    %p89 = scmp.eq.s32.totalorder %s25, 1
    %p90 = por %p88, %p89
    %p91 = scmp.ne.s32.totalorder %s82, %s83
    %p92 = scmp.eq.s32.totalorder %s25, 0
    %p93 = por %p91, %p92
    %p94 = scmp.ne.s32.totalorder %s82, %s83
    %p95 = scmp.eq.s32.totalorder %s26, 1
    %p96 = por %p94, %p95
    %p98 = scmp.ne.s32.totalorder %s83, %s97
    %p99 = scmp.eq.s32.totalorder %s26, 0
    %p100 = por %p98, %p99
    %s102 = sadd.s32 %s101, 1
    %p105 = scmp.eq.s32.totalorder %s20, 1
    %p106 = scmp.ne.s32.totalorder %s101, %s103
    %p107 = scmp.eq.s32.totalorder %s20, 0
    %p108 = por %p106, %p107
    %p109 = scmp.ne.s32.totalorder %s101, %s103
    %p110 = scmp.eq.s32.totalorder %s25, 1
    %p111 = por %p109, %p110
    %p112 = scmp.ne.s32.totalorder %s103, %s104
    %p113 = scmp.eq.s32.totalorder %s25, 0
    %p114 = por %p112, %p113
    %p115 = scmp.ne.s32.totalorder %s103, %s104
    %p116 = scmp.eq.s32.totalorder %s26, 1
    %p117 = por %p115, %p116
    %p119 = scmp.ne.s32.totalorder %s104, %s118
    %p120 = scmp.eq.s32.totalorder %s26, 0
    %p121 = por %p119, %p120
    %s123 = sadd.s32 %s122, 1
    %p126 = scmp.eq.s32.totalorder %s20, 1
    %p127 = scmp.ne.s32.totalorder %s122, %s124
    %p128 = scmp.eq.s32.totalorder %s20, 0
    %p129 = por %p127, %p128
    %p130 = scmp.ne.s32.totalorder %s122, %s124
    %p131 = scmp.eq.s32.totalorder %s25, 1
    %p132 = por %p130, %p131
    %p133 = scmp.ne.s32.totalorder %s124, %s125
    %p134 = scmp.eq.s32.totalorder %s25, 0
    %p135 = por %p133, %p134
    %p136 = scmp.ne.s32.totalorder %s124, %s125
    %p137 = scmp.eq.s32.totalorder %s26, 1
    %p138 = por %p136, %p137
    %p140 = scmp.ne.s32.totalorder %s125, %s139
    %p141 = scmp.eq.s32.totalorder %s26, 0
    %p142 = por %p140, %p141
    %s144 = sadd.s32 %s143, 1
    %p147 = scmp.eq.s32.totalorder %s20, 1
    %p148 = scmp.ne.s32.totalorder %s143, %s145
    %p149 = scmp.eq.s32.totalorder %s20, 0
    %p150 = por %p148, %p149
    %p151 = scmp.ne.s32.totalorder %s143, %s145
    %p152 = scmp.eq.s32.totalorder %s25, 1
    %p153 = por %p151, %p152
    %p154 = scmp.ne.s32.totalorder %s145, %s146
    %p155 = scmp.eq.s32.totalorder %s25, 0
    %p156 = por %p154, %p155
    %p157 = scmp.ne.s32.totalorder %s145, %s146
    %p158 = scmp.eq.s32.totalorder %s26, 1
    %p159 = por %p157, %p158
    %p161 = scmp.ne.s32.totalorder %s146, %s160
    %p162 = scmp.eq.s32.totalorder %s26, 0
    %p163 = por %p161, %p162
    %s165 = sadd.s32 %s164, 1
    %p168 = scmp.eq.s32.totalorder %s20, 1
    %p169 = scmp.ne.s32.totalorder %s164, %s166
    %p170 = scmp.eq.s32.totalorder %s20, 0
    %p171 = por %p169, %p170
    %p172 = scmp.ne.s32.totalorder %s164, %s166
    %p173 = scmp.eq.s32.totalorder %s25, 1
    %p174 = por %p172, %p173
    %p175 = scmp.ne.s32.totalorder %s166, %s167
    %p176 = scmp.eq.s32.totalorder %s25, 0
    %p177 = por %p175, %p176
    %p178 = scmp.ne.s32.totalorder %s166, %s167
    %p179 = scmp.eq.s32.totalorder %s26, 1
    %p180 = por %p178, %p179
    %p182 = scmp.ne.s32.totalorder %s167, %s181
    %p183 = scmp.eq.s32.totalorder %s26, 0
    %p184 = por %p182, %p183
    %s186 = sadd.s32 %s185, 1
    %p189 = scmp.eq.s32.totalorder %s20, 1
    %p190 = scmp.ne.s32.totalorder %s185, %s187
    %p191 = scmp.eq.s32.totalorder %s20, 0
    %p192 = por %p190, %p191
    %p193 = scmp.ne.s32.totalorder %s185, %s187
    %p194 = scmp.eq.s32.totalorder %s25, 1
    %p195 = por %p193, %p194
    %p196 = scmp.ne.s32.totalorder %s187, %s188
    %p197 = scmp.eq.s32.totalorder %s25, 0
    %p198 = por %p196, %p197
    %p199 = scmp.ne.s32.totalorder %s187, %s188
    %p200 = scmp.eq.s32.totalorder %s26, 1
    %p201 = por %p199, %p200
    %p203 = scmp.ne.s32.totalorder %s188, %s202
    %p204 = scmp.eq.s32.totalorder %s26, 0
    %p205 = por %p203, %p204
    %s207 = sadd.s32 %s206, 1
    %p210 = scmp.eq.s32.totalorder %s20, 1
    %p211 = scmp.ne.s32.totalorder %s206, %s208
    %p212 = scmp.eq.s32.totalorder %s20, 0
    %p213 = por %p211, %p212
    %p214 = scmp.ne.s32.totalorder %s206, %s208
    %p215 = scmp.eq.s32.totalorder %s25, 1
    %p216 = por %p214, %p215
    %p217 = scmp.ne.s32.totalorder %s208, %s209
    %p218 = scmp.eq.s32.totalorder %s25, 0
    %p219 = por %p217, %p218
    %p220 = scmp.ne.s32.totalorder %s208, %s209
    %p221 = scmp.eq.s32.totalorder %s26, 1
    %p222 = por %p220, %p221
    %p224 = scmp.ne.s32.totalorder %s209, %s223
    %p225 = scmp.eq.s32.totalorder %s26, 0
    %p226 = por %p224, %p225
    %s228 = sadd.s32 %s227, 1
    %p231 = scmp.eq.s32.totalorder %s20, 1
    %p232 = scmp.ne.s32.totalorder %s227, %s229
    %p233 = scmp.eq.s32.totalorder %s20, 0
    %p234 = por %p232, %p233
    %p235 = scmp.ne.s32.totalorder %s227, %s229
    %p236 = scmp.eq.s32.totalorder %s25, 1
    %p237 = por %p235, %p236
    %p238 = scmp.ne.s32.totalorder %s229, %s230
    %p239 = scmp.eq.s32.totalorder %s25, 0
    %p240 = por %p238, %p239
    %p241 = scmp.ne.s32.totalorder %s229, %s230
    %p242 = scmp.eq.s32.totalorder %s26, 1
    %p243 = por %p241, %p242
    %p245 = scmp.ne.s32.totalorder %s230, %s244
    %p246 = scmp.eq.s32.totalorder %s26, 0
    %p247 = por %p245, %p246
    %s249 = sadd.s32 %s248, 1
    %p252 = scmp.eq.s32.totalorder %s20, 1
    %p253 = scmp.ne.s32.totalorder %s248, %s250
    %p254 = scmp.eq.s32.totalorder %s20, 0
    %p255 = por %p253, %p254
    %p256 = scmp.ne.s32.totalorder %s248, %s250
    %p257 = scmp.eq.s32.totalorder %s25, 1
    %p258 = por %p256, %p257
    %p259 = scmp.ne.s32.totalorder %s250, %s251
    %p260 = scmp.eq.s32.totalorder %s25, 0
    %p261 = por %p259, %p260
    %p262 = scmp.ne.s32.totalorder %s250, %s251
    %p263 = scmp.eq.s32.totalorder %s26, 1
    %p264 = por %p262, %p263
    %p266 = scmp.ne.s32.totalorder %s251, %s265
    %p267 = scmp.eq.s32.totalorder %s26, 0
    %p268 = por %p266, %p267
    %s270 = sadd.s32 %s269, 1
    %p273 = scmp.eq.s32.totalorder %s20, 1
    %p274 = scmp.ne.s32.totalorder %s269, %s271
    %p275 = scmp.eq.s32.totalorder %s20, 0
    %p276 = por %p274, %p275
    %p277 = scmp.ne.s32.totalorder %s269, %s271
    %p278 = scmp.eq.s32.totalorder %s25, 1
    %p279 = por %p277, %p278
    %p280 = scmp.ne.s32.totalorder %s271, %s272
    %p281 = scmp.eq.s32.totalorder %s25, 0
    %p282 = por %p280, %p281
    %p283 = scmp.ne.s32.totalorder %s271, %s272
    %p284 = scmp.eq.s32.totalorder %s26, 1
    %p285 = por %p283, %p284
    %p287 = scmp.ne.s32.totalorder %s272, %s286
    %p288 = scmp.eq.s32.totalorder %s26, 0
    %p289 = por %p287, %p288
    %s291 = sadd.s32 %s290, 1
    %p294 = scmp.eq.s32.totalorder %s20, 1
    %p295 = scmp.ne.s32.totalorder %s290, %s292
    %p296 = scmp.eq.s32.totalorder %s20, 0
    %p297 = por %p295, %p296
    %p298 = scmp.ne.s32.totalorder %s290, %s292
    %p299 = scmp.eq.s32.totalorder %s25, 1
    %p300 = por %p298, %p299
    %p301 = scmp.ne.s32.totalorder %s292, %s293
    %p302 = scmp.eq.s32.totalorder %s25, 0
    %p303 = por %p301, %p302
    %p304 = scmp.ne.s32.totalorder %s292, %s293
    %p305 = scmp.eq.s32.totalorder %s26, 1
    %p306 = por %p304, %p305
    %p308 = scmp.ne.s32.totalorder %s293, %s307
    %p309 = scmp.eq.s32.totalorder %s26, 0
    %p310 = por %p308, %p309
    %s312 = sadd.s32 %s311, 1
    %p315 = scmp.eq.s32.totalorder %s20, 1
    %p316 = scmp.ne.s32.totalorder %s311, %s313
    %p317 = scmp.eq.s32.totalorder %s20, 0
    %p318 = por %p316, %p317
    %p319 = scmp.ne.s32.totalorder %s311, %s313
    %p320 = scmp.eq.s32.totalorder %s25, 1
    %p321 = por %p319, %p320
    %p322 = scmp.ne.s32.totalorder %s313, %s314
    %p323 = scmp.eq.s32.totalorder %s25, 0
    %p324 = por %p322, %p323
    %p325 = scmp.ne.s32.totalorder %s313, %s314
    %p326 = scmp.eq.s32.totalorder %s26, 1
    %p327 = por %p325, %p326
    %p329 = scmp.ne.s32.totalorder %s314, %s328
    %p330 = scmp.eq.s32.totalorder %s26, 0
    %p331 = por %p329, %p330
    %s332 = ssub.s32 %s20, %s27
    %p333 = scmp.eq.s32.totalorder %s332, 0
    %s335 = sadd.s32 %s334, 1
    %s336 = scalar_select %p333, %s334, %s335
    %p339 = pneg %p333
    %p340 = scmp.eq.s32.totalorder %s20, 1
    %p341 = por %p339, %p340
    %p342 = scmp.ne.s32.totalorder %s334, %s337
    %p343 = scmp.eq.s32.totalorder %s20, 0
    %p344 = por %p342, %p343
    %p345 = scmp.ne.s32.totalorder %s334, %s337
    %p346 = scmp.eq.s32.totalorder %s25, 1
    %p347 = por %p345, %p346
    %p348 = scmp.ne.s32.totalorder %s337, %s338
    %p349 = scmp.eq.s32.totalorder %s25, 0
    %p350 = por %p348, %p349
    %p351 = scmp.ne.s32.totalorder %s337, %s338
    %p352 = scmp.eq.s32.totalorder %s26, 1
    %p353 = por %p351, %p352
    %p355 = scmp.ne.s32.totalorder %s338, %s354
    %p356 = scmp.eq.s32.totalorder %s26, 0
    %p357 = por %p355, %p356
    %p358 = scmp.le.s32.totalorder 1, %s20
    %p359 = scmp.lt.s32.totalorder %s20, 3
    %p360 = pnand %p358, %p359
    %p361 = pneg %p360
    // Predicated region
    $region9: #{tpu_custom_call.1} parent=5 // pred_check
      _
    $region10: #{tpu_custom_call.1} parent=5 // pred_check_branch
      %363 = sbr.rel (%p360) target = $region12
    $region11: #{tpu_custom_call.1} parent=5 // pred_region
      %s364 = ssub.s32 %s20, 1
      // Predicated region
      $region13: #{tpu_custom_call.1} parent=11 // pred_check
        %p365 = pneg %p93
      $region14: #{tpu_custom_call.1} parent=11 // pred_check_branch
        %367 = sbr.rel (%p365) target = $region16
      $region15: #{tpu_custom_call.1} parent=11 // pred_region
        _
      $region16: #{tpu_custom_call.1} parent=11 // pred_fallthru
        _
      // Predicated region
      $region17: #{tpu_custom_call.1} parent=11 // pred_check
        %p368 = pneg %p114
      $region18: #{tpu_custom_call.1} parent=11 // pred_check_branch
        %370 = sbr.rel (%p368) target = $region20
      $region19: #{tpu_custom_call.1} parent=11 // pred_region
        _
      $region20: #{tpu_custom_call.1} parent=11 // pred_fallthru
        _
      // Predicated region
      $region21: #{tpu_custom_call.1} parent=11 // pred_check
        %p371 = pneg %p135
      $region22: #{tpu_custom_call.1} parent=11 // pred_check_branch
        %373 = sbr.rel (%p371) target = $region24
      $region23: #{tpu_custom_call.1} parent=11 // pred_region
        _
      $region24: #{tpu_custom_call.1} parent=11 // pred_fallthru
        _
      // Predicated region
      $region25: #{tpu_custom_call.1} parent=11 // pred_check
        %p374 = pneg %p156
      $region26: #{tpu_custom_call.1} parent=11 // pred_check_branch
        %376 = sbr.rel (%p374) target = $region28
      $region27: #{tpu_custom_call.1} parent=11 // pred_region
        _
      $region28: #{tpu_custom_call.1} parent=11 // pred_fallthru
        _
      // Predicated region
      $region29: #{tpu_custom_call.1} parent=11 // pred_check
        %p377 = pneg %p177
      $region30: #{tpu_custom_call.1} parent=11 // pred_check_branch
        %379 = sbr.rel (%p377) target = $region32
      $region31: #{tpu_custom_call.1} parent=11 // pred_region
        _
      $region32: #{tpu_custom_call.1} parent=11 // pred_fallthru
        _
      // Predicated region
      $region33: #{tpu_custom_call.1} parent=11 // pred_check
        %p380 = pneg %p198
      $region34: #{tpu_custom_call.1} parent=11 // pred_check_branch
        %382 = sbr.rel (%p380) target = $region36
      $region35: #{tpu_custom_call.1} parent=11 // pred_region
        _
      $region36: #{tpu_custom_call.1} parent=11 // pred_fallthru
        _
      // Predicated region
      $region37: #{tpu_custom_call.1} parent=11 // pred_check
        %p383 = pneg %p219
      $region38: #{tpu_custom_call.1} parent=11 // pred_check_branch
        %385 = sbr.rel (%p383) target = $region40
      $region39: #{tpu_custom_call.1} parent=11 // pred_region
        _
      $region40: #{tpu_custom_call.1} parent=11 // pred_fallthru
        _
      // Predicated region
      $region41: #{tpu_custom_call.1} parent=11 // pred_check
        %p386 = pneg %p240
      $region42: #{tpu_custom_call.1} parent=11 // pred_check_branch
        %388 = sbr.rel (%p386) target = $region44
      $region43: #{tpu_custom_call.1} parent=11 // pred_region
        _
      $region44: #{tpu_custom_call.1} parent=11 // pred_fallthru
        _
      // Predicated region
      $region45: #{tpu_custom_call.1} parent=11 // pred_check
        %p389 = pneg %p261
      $region46: #{tpu_custom_call.1} parent=11 // pred_check_branch
        %391 = sbr.rel (%p389) target = $region48
      $region47: #{tpu_custom_call.1} parent=11 // pred_region
        _
      $region48: #{tpu_custom_call.1} parent=11 // pred_fallthru
        _
      // Predicated region
      $region49: #{tpu_custom_call.1} parent=11 // pred_check
        %p392 = pneg %p282
      $region50: #{tpu_custom_call.1} parent=11 // pred_check_branch
        %394 = sbr.rel (%p392) target = $region52
      $region51: #{tpu_custom_call.1} parent=11 // pred_region
        _
      $region52: #{tpu_custom_call.1} parent=11 // pred_fallthru
        _
      // Predicated region
      $region53: #{tpu_custom_call.1} parent=11 // pred_check
        %p395 = pneg %p303
      $region54: #{tpu_custom_call.1} parent=11 // pred_check_branch
        %397 = sbr.rel (%p395) target = $region56
      $region55: #{tpu_custom_call.1} parent=11 // pred_region
        _
      $region56: #{tpu_custom_call.1} parent=11 // pred_fallthru
        _
      // Predicated region
      $region57: #{tpu_custom_call.1} parent=11 // pred_check
        %p398 = pneg %p324
      $region58: #{tpu_custom_call.1} parent=11 // pred_check_branch
        %400 = sbr.rel (%p398) target = $region60
      $region59: #{tpu_custom_call.1} parent=11 // pred_region
        _
      $region60: #{tpu_custom_call.1} parent=11 // pred_fallthru
        _
    $region12: #{tpu_custom_call.1} parent=5 // pred_fallthru
      _
    %p401 = scmp.lt.s32.totalorder %s20, 2
    // Predicated region
    $region61: #{tpu_custom_call.1} parent=5 // pred_check
      %p402 = pneg %p401
    $region62: #{tpu_custom_call.1} parent=5 // pred_check_branch
      %404 = sbr.rel (%p402) target = $region64
    $region63: #{tpu_custom_call.1} parent=5 // pred_region
      // Predicated region
      $region65: #{tpu_custom_call.1} parent=63 // pred_check
        %p405 = pneg %p40
      $region66: #{tpu_custom_call.1} parent=63 // pred_check_branch
        %407 = sbr.rel (%p405) target = $region68
      $region67: #{tpu_custom_call.1} parent=63 // pred_region
        %s408 = smul.u32 16, %s20
        %p409 = scmp.lt.s32.totalorder %s408, 31
        %s410 = scalar_select %p409, %s408, 31
        %s411 = smul.addr %s410, 8
        %s412 = scalar_lea.vmem %s0, %s411
        %s413 = smul.u32 16, %s20
      $region68: #{tpu_custom_call.1} parent=63 // pred_fallthru
        _
      // Predicated region
      $region69: #{tpu_custom_call.1} parent=63 // pred_check
        %p414 = pneg %p66
      $region70: #{tpu_custom_call.1} parent=63 // pred_check_branch
        %416 = sbr.rel (%p414) target = $region72
      $region71: #{tpu_custom_call.1} parent=63 // pred_region
        %s417 = smul.u32 16, %s20
        %p418 = scmp.lt.s32.totalorder %s417, 31
        %s419 = scalar_select %p418, %s417, 31
        %s420 = smul.addr %s419, 8
        %s421 = scalar_lea.vmem %s1, %s420
        %s422 = smul.u32 16, %s20
      $region72: #{tpu_custom_call.1} parent=63 // pred_fallthru
        _
    $region64: #{tpu_custom_call.1} parent=5 // pred_fallthru
      _
    %p423 = scmp.le.s32.totalorder 1, %s20
    %p424 = scmp.lt.s32.totalorder %s20, 3
    %p425 = pnand %p423, %p424
    %p426 = pneg %p425
    // Predicated region
    $region73: #{tpu_custom_call.1} parent=5 // pred_check
      _
    $region74: #{tpu_custom_call.1} parent=5 // pred_check_branch
      %428 = sbr.rel (%p425) target = $region76
    $region75: #{tpu_custom_call.1} parent=5 // pred_region
      %s429 = ssub.s32 %s20, 1
      %s430 = smul.u32 16, %s25
      %p431 = scmp.lt.s32.totalorder %s430, 31
      %s432 = scalar_select %p431, %s430, 31
      %s433 = smul.addr %s432, 8
      %s434 = scalar_lea.vmem %s0, %s433
      %p435 = pneg %p46
      %p436 = pneg %p43
      %s437 = smul.u32 16, %s25
      %p438 = scmp.lt.s32.totalorder %s437, 31
      %s439 = scalar_select %p438, %s437, 31
      %s440 = smul.addr %s439, 8
      %s441 = scalar_lea.vmem %s1, %s440
      %p442 = pneg %p72
      %p443 = pneg %p69
      %p444 = pneg %p93
      %p445 = pneg %p90
      %p446 = pneg %p114
      %p447 = pneg %p111
      %p448 = pneg %p135
      %p449 = pneg %p132
      %p450 = pneg %p156
      %p451 = pneg %p153
      %p452 = pneg %p177
      %p453 = pneg %p174
      %p454 = pneg %p198
      %p455 = pneg %p195
      %p456 = pneg %p219
      %p457 = pneg %p216
      %p458 = pneg %p240
      %p459 = pneg %p237
      %p460 = pneg %p261
      %p461 = pneg %p258
      %p462 = pneg %p282
      %p463 = pneg %p279
      %p464 = pneg %p303
      %p465 = pneg %p300
      %p466 = pneg %p324
      %p467 = pneg %p321
      %p468 = pneg %p350
      %p469 = pneg %p347
      %s470 = smul.u32 16, %s25
      %p471 = scmp.lt.s32.totalorder %s470, 31
      %s472 = scalar_select %p471, %s470, 31
      %s473 = smul.addr %s472, 8
      %s474 = scalar_lea.vmem %s14, %s473
      %s475 = smul.u32 16, %s25
      %p476 = scmp.lt.s32.totalorder %s475, 31
      %s477 = scalar_select %p476, %s475, 31
      %s478 = smul.addr %s477, 8
      %s479 = scalar_lea.vmem %s0, %s478
      %s480 = smul.u32 16, %s25
      %s481 = smul.u32 16, %s25
      %p482 = scmp.lt.s32.totalorder %s481, 31
      %s483 = scalar_select %p482, %s481, 31
      %s484 = smul.addr %s483, 8
      %s485 = scalar_lea.vmem %s1, %s484
      %s486 = smul.u32 16, %s25
      %s487 = smul.u32 16, %s25
      %p488 = scmp.lt.s32.totalorder %s487, 31
      %s489 = scalar_select %p488, %s487, 31
      %s490 = smul.addr %s489, 8
      %s491 = scalar_lea.vmem %s14, %s490
      %s492 = smul.u32 16, %s25
      %v493 = vld [vmem:[%s479] sm:$0xff]
      %v494 = vld [vmem:[%s479 + $0x8] sm:$0xff]
      %v495 = vld [vmem:[%s479 + $0x10] sm:$0xff]
      %v496 = vld [vmem:[%s479 + $0x18] sm:$0xff]
      %v497 = vld [vmem:[%s479 + $0x20] sm:$0xff]
      %v498 = vld [vmem:[%s479 + $0x28] sm:$0xff]
      %v499 = vld [vmem:[%s479 + $0x30] sm:$0xff]
      %v500 = vld [vmem:[%s479 + $0x38] sm:$0xff]
      %v501 = vld [vmem:[%s479 + $0x40] sm:$0xff]
      %v502 = vld [vmem:[%s479 + $0x48] sm:$0xff]
      %v503 = vld [vmem:[%s479 + $0x50] sm:$0xff]
      %v504 = vld [vmem:[%s479 + $0x58] sm:$0xff]
      %v505 = vld [vmem:[%s479 + $0x60] sm:$0xff]
      %v506 = vld [vmem:[%s479 + $0x68] sm:$0xff]
      %v507 = vld [vmem:[%s479 + $0x70] sm:$0xff]
      %v508 = vld [vmem:[%s479 + $0x78] sm:$0xff]
      %v509 = vld [vmem:[%s2] sm:$0xff]
      %v510 = vld [vmem:[%s2 + $0x8] sm:$0xff]
      %v511 = vld [vmem:[%s3] sm:$0x1]
      %v513 = vlaneseq
      %v514 = vshrl.u32 %v513, 7
      %v515 = vsub.s32 0, %v514
      %v516 = vrot.slane %v511, %v515
      %vm518 = vcmask 130048
      %v520 = vsel %vm518, %v493, 0
      %v523 = vsel %vm518, %v494, 0
      %v526 = vsel %vm518, %v495, 0
      %v529 = vsel %vm518, %v496, 0
      %v532 = vsel %vm518, %v497, 0
      %v535 = vsel %vm518, %v498, 0
      %v538 = vsel %vm518, %v499, 0
      %v541 = vsel %vm518, %v500, 0
      %v544 = vsel %vm518, %v501, 0
      %v547 = vsel %vm518, %v502, 0
      %v550 = vsel %vm518, %v503, 0
      %v553 = vsel %vm518, %v504, 0
      %v556 = vsel %vm518, %v505, 0
      %v559 = vsel %vm518, %v506, 0
      %v562 = vsel %vm518, %v507, 0
      %v565 = vsel %vm518, %v508, 0
      %567 = vmatprep.subr.mxu0 0.0
      %568 = vmatpush1.msra.mxu0 0.0
      %569 = vmatprep.subr.mxu0 0.0
      %570 = vmatpush1.msra.mxu0 0.0
      %571 = vmatprep.subr.mxu0 0.0
      %572 = vmatpush1.msra.mxu0 0.0
      %573 = vmatprep.subr.mxu0 0.0
      %574 = vmatpush1.msra.mxu0 0.0
      %575 = vmatprep.subr.mxu0 0.0
      %576 = vmatpush1.msra.mxu0 0.0
      %577 = vmatprep.subr.mxu0 0.0
      %578 = vmatpush1.msra.mxu0 0.0
      %579 = vmatprep.subr.mxu0 0.0
      %580 = vmatpush1.msra.mxu0 0.0
      %581 = vmatprep.subr.mxu0 0.0
      %582 = vmatpush1.msra.mxu0 0.0
      %583 = vmatprep.subr.mxu0 0.0
      %584 = vmatpush1.msra.mxu0 0.0
      %585 = vmatprep.subr.mxu0 0.0
      %586 = vmatpush1.msra.mxu0 0.0
      %587 = vmatprep.subr.mxu0 0.0
      %588 = vmatpush1.msra.mxu0 0.0
      %589 = vmatprep.subr.mxu0 0.0
      %590 = vmatpush1.msra.mxu0 0.0
      %591 = vmatprep.subr.mxu0 0.0
      %592 = vmatpush1.msra.mxu0 0.0
      %593 = vmatprep.subr.mxu0 0.0
      %594 = vmatpush1.msra.mxu0 0.0
      %595 = vmatprep.subr.mxu0 0.0
      %596 = vmatpush1.msra.mxu0 %v510
      %597 = vmatprep.subr.mxu0 0.0
      %598 = vmatpush1.msra.mxu0 %v509
      %599 = vmatprep.subr.mxu0 0.0
      %600 = vmatpush2.msra.mxu0 0.0
      %601 = vmatprep.subr.mxu0 0.0
      %602 = vmatpush2.msra.mxu0 0.0
      %603 = vmatprep.subr.mxu0 0.0
      %604 = vmatpush2.msra.mxu0 0.0
      %605 = vmatprep.subr.mxu0 0.0
      %606 = vmatpush2.msra.mxu0 0.0
      %607 = vmatprep.subr.mxu0 0.0
      %608 = vmatpush2.msra.mxu0 0.0
      %609 = vmatprep.subr.mxu0 0.0
      %610 = vmatpush2.msra.mxu0 0.0
      %611 = vmatprep.subr.mxu0 0.0
      %612 = vmatpush2.msra.mxu0 0.0
      %613 = vmatprep.subr.mxu0 0.0
      %614 = vmatpush2.msra.mxu0 0.0
      %615 = vmatprep.subr.mxu0 0.0
      %616 = vmatpush2.msra.mxu0 0.0
      %617 = vmatprep.subr.mxu0 0.0
      %618 = vmatpush2.msra.mxu0 0.0
      %619 = vmatprep.subr.mxu0 0.0
      %620 = vmatpush2.msra.mxu0 0.0
      %621 = vmatprep.subr.mxu0 0.0
      %622 = vmatpush2.msra.mxu0 0.0
      %623 = vmatprep.subr.mxu0 0.0
      %624 = vmatpush2.msra.mxu0 0.0
      %625 = vmatprep.subr.mxu0 0.0
      %626 = vmatpush2.msra.mxu0 0.0
      %627 = vmatprep.subr.mxu0 0.0
      %628 = vmatpush2.msra.mxu0 0.0
      %629 = vmatprep.subr.mxu0 0.0
      %630 = vmatpush2.msra.mxu0 0.0
      %631 = vmatprep.mubr.f32.mxu0 0.0
      %632 = vmatmul.mubr.f32.gmra.mxu0 %v520
      %v633 = vpop.f32.mrf.mxu0
      %v634 = vadd.f32 %v516, %v633
      %v635 = vpop.f32.mrf.mxu0
      %636 = vmatprep.mubr.f32.mxu0 0.0
      %637 = vmatmul.mubr.f32.gmra.mxu0 %v523
      %v638 = vpop.f32.mrf.mxu0
      %v639 = vadd.f32 %v516, %v638
      %v640 = vpop.f32.mrf.mxu0
      %641 = vmatprep.mubr.f32.mxu0 0.0
      %642 = vmatmul.mubr.f32.gmra.mxu0 %v526
      %v643 = vpop.f32.mrf.mxu0
      %v644 = vadd.f32 %v516, %v643
      %v645 = vpop.f32.mrf.mxu0
      %646 = vmatprep.mubr.f32.mxu0 0.0
      %647 = vmatmul.mubr.f32.gmra.mxu0 %v529
      %v648 = vpop.f32.mrf.mxu0
      %v649 = vadd.f32 %v516, %v648
      %v650 = vpop.f32.mrf.mxu0
      %651 = vmatprep.mubr.f32.mxu0 0.0
      %652 = vmatmul.mubr.f32.gmra.mxu0 %v532
      %v653 = vpop.f32.mrf.mxu0
      %v654 = vadd.f32 %v516, %v653
      %v655 = vpop.f32.mrf.mxu0
      %656 = vmatprep.mubr.f32.mxu0 0.0
      %657 = vmatmul.mubr.f32.gmra.mxu0 %v535
      %v658 = vpop.f32.mrf.mxu0
      %v659 = vadd.f32 %v516, %v658
      %v660 = vpop.f32.mrf.mxu0
      %661 = vmatprep.mubr.f32.mxu0 0.0
      %662 = vmatmul.mubr.f32.gmra.mxu0 %v538
      %v663 = vpop.f32.mrf.mxu0
      %v664 = vadd.f32 %v516, %v663
      %v665 = vpop.f32.mrf.mxu0
      %666 = vmatprep.mubr.f32.mxu0 0.0
      %667 = vmatmul.mubr.f32.gmra.mxu0 %v541
      %v668 = vpop.f32.mrf.mxu0
      %v669 = vadd.f32 %v516, %v668
      %v670 = vpop.f32.mrf.mxu0
      %671 = vmatprep.mubr.f32.mxu0 0.0
      %672 = vmatmul.mubr.f32.gmra.mxu0 %v544
      %v673 = vpop.f32.mrf.mxu0
      %v674 = vadd.f32 %v516, %v673
      %v675 = vpop.f32.mrf.mxu0
      %676 = vmatprep.mubr.f32.mxu0 0.0
      %677 = vmatmul.mubr.f32.gmra.mxu0 %v547
      %v678 = vpop.f32.mrf.mxu0
      %v679 = vadd.f32 %v516, %v678
      %v680 = vpop.f32.mrf.mxu0
      %681 = vmatprep.mubr.f32.mxu0 0.0
      %682 = vmatmul.mubr.f32.gmra.mxu0 %v550
      %v683 = vpop.f32.mrf.mxu0
      %v684 = vadd.f32 %v516, %v683
      %v685 = vpop.f32.mrf.mxu0
      %686 = vmatprep.mubr.f32.mxu0 0.0
      %687 = vmatmul.mubr.f32.gmra.mxu0 %v553
      %v688 = vpop.f32.mrf.mxu0
      %v689 = vadd.f32 %v516, %v688
      %v690 = vpop.f32.mrf.mxu0
      %691 = vmatprep.mubr.f32.mxu0 0.0
      %692 = vmatmul.mubr.f32.gmra.mxu0 %v556
      %v693 = vpop.f32.mrf.mxu0
      %v694 = vadd.f32 %v516, %v693
      %v695 = vpop.f32.mrf.mxu0
      %696 = vmatprep.mubr.f32.mxu0 0.0
      %697 = vmatmul.mubr.f32.gmra.mxu0 %v559
      %v698 = vpop.f32.mrf.mxu0
      %v699 = vadd.f32 %v516, %v698
      %v700 = vpop.f32.mrf.mxu0
      %701 = vmatprep.mubr.f32.mxu0 0.0
      %702 = vmatmul.mubr.f32.gmra.mxu0 %v562
      %v703 = vpop.f32.mrf.mxu0
      %v704 = vadd.f32 %v516, %v703
      %v705 = vpop.f32.mrf.mxu0
      %706 = vmatprep.mubr.f32.mxu0 0.0
      %707 = vmatmul.mubr.f32.gmra.mxu0 %v565
      %v708 = vpop.f32.mrf.mxu0
      %v709 = vadd.f32 %v516, %v708
      %v710 = vpop.f32.mrf.mxu0
      %711 = vdwg.mxu0
      %v712 = vld [vmem:[%s4] sm:$0xff]
      %v713 = vld [vmem:[%s4 + $0x8] sm:$0xff]
      %v714 = vld [vmem:[%s5] sm:$0x1]
      %v716 = vlaneseq
      %v717 = vshrl.u32 %v716, 7
      %v718 = vsub.s32 0, %v717
      %v719 = vrot.slane %v714, %v718
      %721 = vmatprep.subr.mxu0 0.0
      %722 = vmatpush1.msra.mxu0 0.0
      %723 = vmatprep.subr.mxu0 0.0
      %724 = vmatpush1.msra.mxu0 0.0
      %725 = vmatprep.subr.mxu0 0.0
      %726 = vmatpush1.msra.mxu0 0.0
      %727 = vmatprep.subr.mxu0 0.0
      %728 = vmatpush1.msra.mxu0 0.0
      %729 = vmatprep.subr.mxu0 0.0
      %730 = vmatpush1.msra.mxu0 0.0
      %731 = vmatprep.subr.mxu0 0.0
      %732 = vmatpush1.msra.mxu0 0.0
      %733 = vmatprep.subr.mxu0 0.0
      %734 = vmatpush1.msra.mxu0 0.0
      %735 = vmatprep.subr.mxu0 0.0
      %736 = vmatpush1.msra.mxu0 0.0
      %737 = vmatprep.subr.mxu0 0.0
      %738 = vmatpush1.msra.mxu0 0.0
      %739 = vmatprep.subr.mxu0 0.0
      %740 = vmatpush1.msra.mxu0 0.0
      %741 = vmatprep.subr.mxu0 0.0
      %742 = vmatpush1.msra.mxu0 0.0
      %743 = vmatprep.subr.mxu0 0.0
      %744 = vmatpush1.msra.mxu0 0.0
      %745 = vmatprep.subr.mxu0 0.0
      %746 = vmatpush1.msra.mxu0 0.0
      %747 = vmatprep.subr.mxu0 0.0
      %748 = vmatpush1.msra.mxu0 0.0
      %749 = vmatprep.subr.mxu0 0.0
      %750 = vmatpush1.msra.mxu0 %v713
      %751 = vmatprep.subr.mxu0 0.0
      %752 = vmatpush1.msra.mxu0 %v712
      %753 = vmatprep.subr.mxu0 0.0
      %754 = vmatpush2.msra.mxu0 0.0
      %755 = vmatprep.subr.mxu0 0.0
      %756 = vmatpush2.msra.mxu0 0.0
      %757 = vmatprep.subr.mxu0 0.0
      %758 = vmatpush2.msra.mxu0 0.0
      %759 = vmatprep.subr.mxu0 0.0
      %760 = vmatpush2.msra.mxu0 0.0
      %761 = vmatprep.subr.mxu0 0.0
      %762 = vmatpush2.msra.mxu0 0.0
      %763 = vmatprep.subr.mxu0 0.0
      %764 = vmatpush2.msra.mxu0 0.0
      %765 = vmatprep.subr.mxu0 0.0
      %766 = vmatpush2.msra.mxu0 0.0
      %767 = vmatprep.subr.mxu0 0.0
      %768 = vmatpush2.msra.mxu0 0.0
      %769 = vmatprep.subr.mxu0 0.0
      %770 = vmatpush2.msra.mxu0 0.0
      %771 = vmatprep.subr.mxu0 0.0
      %772 = vmatpush2.msra.mxu0 0.0
      %773 = vmatprep.subr.mxu0 0.0
      %774 = vmatpush2.msra.mxu0 0.0
      %775 = vmatprep.subr.mxu0 0.0
      %776 = vmatpush2.msra.mxu0 0.0
      %777 = vmatprep.subr.mxu0 0.0
      %778 = vmatpush2.msra.mxu0 0.0
      %779 = vmatprep.subr.mxu0 0.0
      %780 = vmatpush2.msra.mxu0 0.0
      %781 = vmatprep.subr.mxu0 0.0
      %782 = vmatpush2.msra.mxu0 0.0
      %783 = vmatprep.subr.mxu0 0.0
      %784 = vmatpush2.msra.mxu0 0.0
      %785 = vmatprep.mubr.f32.mxu0 0.0
      %786 = vmatmul.mubr.f32.gmra.mxu0 %v520
      %v787 = vpop.f32.mrf.mxu0
      %v788 = vadd.f32 %v719, %v787
      %v789 = vpop.f32.mrf.mxu0
      %790 = vmatprep.mubr.f32.mxu0 0.0
      %791 = vmatmul.mubr.f32.gmra.mxu0 %v523
      %v792 = vpop.f32.mrf.mxu0
      %v793 = vadd.f32 %v719, %v792
      %v794 = vpop.f32.mrf.mxu0
      %795 = vmatprep.mubr.f32.mxu0 0.0
      %796 = vmatmul.mubr.f32.gmra.mxu0 %v526
      %v797 = vpop.f32.mrf.mxu0
      %v798 = vadd.f32 %v719, %v797
      %v799 = vpop.f32.mrf.mxu0
      %800 = vmatprep.mubr.f32.mxu0 0.0
      %801 = vmatmul.mubr.f32.gmra.mxu0 %v529
      %v802 = vpop.f32.mrf.mxu0
      %v803 = vadd.f32 %v719, %v802
      %v804 = vpop.f32.mrf.mxu0
      %805 = vmatprep.mubr.f32.mxu0 0.0
      %806 = vmatmul.mubr.f32.gmra.mxu0 %v532
      %v807 = vpop.f32.mrf.mxu0
      %v808 = vadd.f32 %v719, %v807
      %v809 = vpop.f32.mrf.mxu0
      %810 = vmatprep.mubr.f32.mxu0 0.0
      %811 = vmatmul.mubr.f32.gmra.mxu0 %v535
      %v812 = vpop.f32.mrf.mxu0
      %v813 = vadd.f32 %v719, %v812
      %v814 = vpop.f32.mrf.mxu0
      %815 = vmatprep.mubr.f32.mxu0 0.0
      %816 = vmatmul.mubr.f32.gmra.mxu0 %v538
      %v817 = vpop.f32.mrf.mxu0
      %v818 = vadd.f32 %v719, %v817
      %v819 = vpop.f32.mrf.mxu0
      %820 = vmatprep.mubr.f32.mxu0 0.0
      %821 = vmatmul.mubr.f32.gmra.mxu0 %v541
      %v822 = vpop.f32.mrf.mxu0
      %v823 = vadd.f32 %v719, %v822
      %v824 = vpop.f32.mrf.mxu0
      %825 = vmatprep.mubr.f32.mxu0 0.0
      %826 = vmatmul.mubr.f32.gmra.mxu0 %v544
      %v827 = vpop.f32.mrf.mxu0
      %v828 = vadd.f32 %v719, %v827
      %v829 = vpop.f32.mrf.mxu0
      %830 = vmatprep.mubr.f32.mxu0 0.0
      %831 = vmatmul.mubr.f32.gmra.mxu0 %v547
      %v832 = vpop.f32.mrf.mxu0
      %v833 = vadd.f32 %v719, %v832
      %v834 = vpop.f32.mrf.mxu0
      %835 = vmatprep.mubr.f32.mxu0 0.0
      %836 = vmatmul.mubr.f32.gmra.mxu0 %v550
      %v837 = vpop.f32.mrf.mxu0
      %v838 = vadd.f32 %v719, %v837
      %v839 = vpop.f32.mrf.mxu0
      %840 = vmatprep.mubr.f32.mxu0 0.0
      %841 = vmatmul.mubr.f32.gmra.mxu0 %v553
      %v842 = vpop.f32.mrf.mxu0
      %v843 = vadd.f32 %v719, %v842
      %v844 = vpop.f32.mrf.mxu0
      %845 = vmatprep.mubr.f32.mxu0 0.0
      %846 = vmatmul.mubr.f32.gmra.mxu0 %v556
      %v847 = vpop.f32.mrf.mxu0
      %v848 = vadd.f32 %v719, %v847
      %v849 = vpop.f32.mrf.mxu0
      %850 = vmatprep.mubr.f32.mxu0 0.0
      %851 = vmatmul.mubr.f32.gmra.mxu0 %v559
      %v852 = vpop.f32.mrf.mxu0
      %v853 = vadd.f32 %v719, %v852
      %v854 = vpop.f32.mrf.mxu0
      %855 = vmatprep.mubr.f32.mxu0 0.0
      %856 = vmatmul.mubr.f32.gmra.mxu0 %v562
      %v857 = vpop.f32.mrf.mxu0
      %v858 = vadd.f32 %v719, %v857
      %v859 = vpop.f32.mrf.mxu0
      %860 = vmatprep.mubr.f32.mxu0 0.0
      %861 = vmatmul.mubr.f32.gmra.mxu0 %v565
      %v862 = vpop.f32.mrf.mxu0
      %v863 = vadd.f32 %v719, %v862
      %v864 = vpop.f32.mrf.mxu0
      %865 = vdwg.mxu0
      %v866 = vtanh.pop %v634
      %v867 = vtanh.pop %v639
      %v868 = vtanh.pop %v644
      %v869 = vtanh.pop %v649
      %v870 = vtanh.pop %v654
      %v871 = vtanh.pop %v659
      %v872 = vtanh.pop %v664
      %v873 = vtanh.pop %v669
      %v874 = vtanh.pop %v674
      %v875 = vtanh.pop %v679
      %v876 = vtanh.pop %v684
      %v877 = vtanh.pop %v689
      %v878 = vtanh.pop %v694
      %v879 = vtanh.pop %v699
      %v880 = vtanh.pop %v704
      %v881 = vtanh.pop %v709
      %v882 = vmul.f32 %v788, 0.5
      %v883 = vmul.f32 %v793, 0.5
      %v884 = vmul.f32 %v798, 0.5
      %v885 = vmul.f32 %v803, 0.5
      %v886 = vmul.f32 %v808, 0.5
      %v887 = vmul.f32 %v813, 0.5
      %v888 = vmul.f32 %v818, 0.5
      %v889 = vmul.f32 %v823, 0.5
      %v890 = vmul.f32 %v828, 0.5
      %v891 = vmul.f32 %v833, 0.5
      %v892 = vmul.f32 %v838, 0.5
      %v893 = vmul.f32 %v843, 0.5
      %v894 = vmul.f32 %v848, 0.5
      %v895 = vmul.f32 %v853, 0.5
      %v896 = vmul.f32 %v858, 0.5
      %v897 = vmul.f32 %v863, 0.5
      %v898 = vmax.f32 %v788, %v882
      %v899 = vmax.f32 %v793, %v883
      %v900 = vmax.f32 %v798, %v884
      %v901 = vmax.f32 %v803, %v885
      %v902 = vmax.f32 %v808, %v886
      %v903 = vmax.f32 %v813, %v887
      %v904 = vmax.f32 %v818, %v888
      %v905 = vmax.f32 %v823, %v889
      %v906 = vmax.f32 %v828, %v890
      %v907 = vmax.f32 %v833, %v891
      %v908 = vmax.f32 %v838, %v892
      %v909 = vmax.f32 %v843, %v893
      %v910 = vmax.f32 %v848, %v894
      %v911 = vmax.f32 %v853, %v895
      %v912 = vmax.f32 %v858, %v896
      %v913 = vmax.f32 %v863, %v897
      %v914 = vld [vmem:[%s6] sm:$0xff]
      %v915 = vld [vmem:[%s6 + $0x8] sm:$0xff]
      %v916 = vld [vmem:[%s6 + $0x10] sm:$0xff]
      %v917 = vld [vmem:[%s6 + $0x18] sm:$0xff]
      %v918 = vld [vmem:[%s7] sm:$0x1]
      %v920 = vlaneseq
      %v921 = vshrl.u32 %v920, 7
      %v922 = vsub.s32 0, %v921
      %v923 = vrot.slane %v918, %v922
      %vm925 = vcmask 261120
      %v927 = vsel %vm925, %v866, 0
      %v930 = vsel %vm925, %v867, 0
      %v933 = vsel %vm925, %v868, 0
      %v936 = vsel %vm925, %v869, 0
      %v939 = vsel %vm925, %v870, 0
      %v942 = vsel %vm925, %v871, 0
      %v945 = vsel %vm925, %v872, 0
      %v948 = vsel %vm925, %v873, 0
      %v951 = vsel %vm925, %v874, 0
      %v954 = vsel %vm925, %v875, 0
      %v957 = vsel %vm925, %v876, 0
      %v960 = vsel %vm925, %v877, 0
      %v963 = vsel %vm925, %v878, 0
      %v966 = vsel %vm925, %v879, 0
      %v969 = vsel %vm925, %v880, 0
      %v972 = vsel %vm925, %v881, 0
      %974 = vmatprep.subr.mxu0 0.0
      %975 = vmatpush1.msra.mxu0 0.0
      %976 = vmatprep.subr.mxu0 0.0
      %977 = vmatpush1.msra.mxu0 0.0
      %978 = vmatprep.subr.mxu0 0.0
      %979 = vmatpush1.msra.mxu0 0.0
      %980 = vmatprep.subr.mxu0 0.0
      %981 = vmatpush1.msra.mxu0 0.0
      %982 = vmatprep.subr.mxu0 0.0
      %983 = vmatpush1.msra.mxu0 0.0
      %984 = vmatprep.subr.mxu0 0.0
      %985 = vmatpush1.msra.mxu0 0.0
      %986 = vmatprep.subr.mxu0 0.0
      %987 = vmatpush1.msra.mxu0 0.0
      %988 = vmatprep.subr.mxu0 0.0
      %989 = vmatpush1.msra.mxu0 0.0
      %990 = vmatprep.subr.mxu0 0.0
      %991 = vmatpush1.msra.mxu0 0.0
      %992 = vmatprep.subr.mxu0 0.0
      %993 = vmatpush1.msra.mxu0 0.0
      %994 = vmatprep.subr.mxu0 0.0
      %995 = vmatpush1.msra.mxu0 0.0
      %996 = vmatprep.subr.mxu0 0.0
      %997 = vmatpush1.msra.mxu0 0.0
      %998 = vmatprep.subr.mxu0 0.0
      %999 = vmatpush1.msra.mxu0 %v917
      %1000 = vmatprep.subr.mxu0 0.0
      %1001 = vmatpush1.msra.mxu0 %v916
      %1002 = vmatprep.subr.mxu0 0.0
      %1003 = vmatpush1.msra.mxu0 %v915
      %1004 = vmatprep.subr.mxu0 0.0
      %1005 = vmatpush1.msra.mxu0 %v914
      %1006 = vmatprep.subr.mxu0 0.0
      %1007 = vmatpush2.msra.mxu0 0.0
      %1008 = vmatprep.subr.mxu0 0.0
      %1009 = vmatpush2.msra.mxu0 0.0
      %1010 = vmatprep.subr.mxu0 0.0
      %1011 = vmatpush2.msra.mxu0 0.0
      %1012 = vmatprep.subr.mxu0 0.0
      %1013 = vmatpush2.msra.mxu0 0.0
      %1014 = vmatprep.subr.mxu0 0.0
      %1015 = vmatpush2.msra.mxu0 0.0
      %1016 = vmatprep.subr.mxu0 0.0
      %1017 = vmatpush2.msra.mxu0 0.0
      %1018 = vmatprep.subr.mxu0 0.0
      %1019 = vmatpush2.msra.mxu0 0.0
      %1020 = vmatprep.subr.mxu0 0.0
      %1021 = vmatpush2.msra.mxu0 0.0
      %1022 = vmatprep.subr.mxu0 0.0
      %1023 = vmatpush2.msra.mxu0 0.0
      %1024 = vmatprep.subr.mxu0 0.0
      %1025 = vmatpush2.msra.mxu0 0.0
      %1026 = vmatprep.subr.mxu0 0.0
      %1027 = vmatpush2.msra.mxu0 0.0
      %1028 = vmatprep.subr.mxu0 0.0
      %1029 = vmatpush2.msra.mxu0 0.0
      %1030 = vmatprep.subr.mxu0 0.0
      %1031 = vmatpush2.msra.mxu0 0.0
      %1032 = vmatprep.subr.mxu0 0.0
      %1033 = vmatpush2.msra.mxu0 0.0
      %1034 = vmatprep.subr.mxu0 0.0
      %1035 = vmatpush2.msra.mxu0 0.0
      %1036 = vmatprep.subr.mxu0 0.0
      %1037 = vmatpush2.msra.mxu0 0.0
      %1038 = vmatprep.mubr.f32.mxu0 0.0
      %1039 = vmatmul.mubr.f32.gmra.mxu0 %v927
      %v1040 = vpop.f32.mrf.mxu0
      %v1041 = vadd.f32 %v923, %v1040
      %v1042 = vpop.f32.mrf.mxu0
      %1043 = vmatprep.mubr.f32.mxu0 0.0
      %1044 = vmatmul.mubr.f32.gmra.mxu0 %v930
      %v1045 = vpop.f32.mrf.mxu0
      %v1046 = vadd.f32 %v923, %v1045
      %v1047 = vpop.f32.mrf.mxu0
      %1048 = vmatprep.mubr.f32.mxu0 0.0
      %1049 = vmatmul.mubr.f32.gmra.mxu0 %v933
      %v1050 = vpop.f32.mrf.mxu0
      %v1051 = vadd.f32 %v923, %v1050
      %v1052 = vpop.f32.mrf.mxu0
      %1053 = vmatprep.mubr.f32.mxu0 0.0
      %1054 = vmatmul.mubr.f32.gmra.mxu0 %v936
      %v1055 = vpop.f32.mrf.mxu0
      %v1056 = vadd.f32 %v923, %v1055
      %v1057 = vpop.f32.mrf.mxu0
      %1058 = vmatprep.mubr.f32.mxu0 0.0
      %1059 = vmatmul.mubr.f32.gmra.mxu0 %v939
      %v1060 = vpop.f32.mrf.mxu0
      %v1061 = vadd.f32 %v923, %v1060
      %v1062 = vpop.f32.mrf.mxu0
      %1063 = vmatprep.mubr.f32.mxu0 0.0
      %1064 = vmatmul.mubr.f32.gmra.mxu0 %v942
      %v1065 = vpop.f32.mrf.mxu0
      %v1066 = vadd.f32 %v923, %v1065
      %v1067 = vpop.f32.mrf.mxu0
      %1068 = vmatprep.mubr.f32.mxu0 0.0
      %1069 = vmatmul.mubr.f32.gmra.mxu0 %v945
      %v1070 = vpop.f32.mrf.mxu0
      %v1071 = vadd.f32 %v923, %v1070
      %v1072 = vpop.f32.mrf.mxu0
      %1073 = vmatprep.mubr.f32.mxu0 0.0
      %1074 = vmatmul.mubr.f32.gmra.mxu0 %v948
      %v1075 = vpop.f32.mrf.mxu0
      %v1076 = vadd.f32 %v923, %v1075
      %v1077 = vpop.f32.mrf.mxu0
      %1078 = vmatprep.mubr.f32.mxu0 0.0
      %1079 = vmatmul.mubr.f32.gmra.mxu0 %v951
      %v1080 = vpop.f32.mrf.mxu0
      %v1081 = vadd.f32 %v923, %v1080
      %v1082 = vpop.f32.mrf.mxu0
      %1083 = vmatprep.mubr.f32.mxu0 0.0
      %1084 = vmatmul.mubr.f32.gmra.mxu0 %v954
      %v1085 = vpop.f32.mrf.mxu0
      %v1086 = vadd.f32 %v923, %v1085
      %v1087 = vpop.f32.mrf.mxu0
      %1088 = vmatprep.mubr.f32.mxu0 0.0
      %1089 = vmatmul.mubr.f32.gmra.mxu0 %v957
      %v1090 = vpop.f32.mrf.mxu0
      %v1091 = vadd.f32 %v923, %v1090
      %v1092 = vpop.f32.mrf.mxu0
      %1093 = vmatprep.mubr.f32.mxu0 0.0
      %1094 = vmatmul.mubr.f32.gmra.mxu0 %v960
      %v1095 = vpop.f32.mrf.mxu0
      %v1096 = vadd.f32 %v923, %v1095
      %v1097 = vpop.f32.mrf.mxu0
      %1098 = vmatprep.mubr.f32.mxu0 0.0
      %1099 = vmatmul.mubr.f32.gmra.mxu0 %v963
      %v1100 = vpop.f32.mrf.mxu0
      %v1101 = vadd.f32 %v923, %v1100
      %v1102 = vpop.f32.mrf.mxu0
      %1103 = vmatprep.mubr.f32.mxu0 0.0
      %1104 = vmatmul.mubr.f32.gmra.mxu0 %v966
      %v1105 = vpop.f32.mrf.mxu0
      %v1106 = vadd.f32 %v923, %v1105
      %v1107 = vpop.f32.mrf.mxu0
      %1108 = vmatprep.mubr.f32.mxu0 0.0
      %1109 = vmatmul.mubr.f32.gmra.mxu0 %v969
      %v1110 = vpop.f32.mrf.mxu0
      %v1111 = vadd.f32 %v923, %v1110
      %v1112 = vpop.f32.mrf.mxu0
      %1113 = vmatprep.mubr.f32.mxu0 0.0
      %1114 = vmatmul.mubr.f32.gmra.mxu0 %v972
      %v1115 = vpop.f32.mrf.mxu0
      %v1116 = vadd.f32 %v923, %v1115
      %v1117 = vpop.f32.mrf.mxu0
      %1118 = vdwg.mxu0
      %v1119 = vld [vmem:[%s8] sm:$0xff]
      %v1120 = vld [vmem:[%s8 + $0x8] sm:$0xff]
      %v1121 = vld [vmem:[%s8 + $0x10] sm:$0xff]
      %v1122 = vld [vmem:[%s8 + $0x18] sm:$0xff]
      %v1123 = vld [vmem:[%s9] sm:$0x1]
      %v1125 = vlaneseq
      %v1126 = vshrl.u32 %v1125, 7
      %v1127 = vsub.s32 0, %v1126
      %v1128 = vrot.slane %v1123, %v1127
      %v1131 = vsel %vm925, %v898, 0
      %v1134 = vsel %vm925, %v899, 0
      %v1137 = vsel %vm925, %v900, 0
      %v1140 = vsel %vm925, %v901, 0
      %v1143 = vsel %vm925, %v902, 0
      %v1146 = vsel %vm925, %v903, 0
      %v1149 = vsel %vm925, %v904, 0
      %v1152 = vsel %vm925, %v905, 0
      %v1155 = vsel %vm925, %v906, 0
      %v1158 = vsel %vm925, %v907, 0
      %v1161 = vsel %vm925, %v908, 0
      %v1164 = vsel %vm925, %v909, 0
      %v1167 = vsel %vm925, %v910, 0
      %v1170 = vsel %vm925, %v911, 0
      %v1173 = vsel %vm925, %v912, 0
      %v1176 = vsel %vm925, %v913, 0
      %1178 = vmatprep.subr.mxu0 0.0
      %1179 = vmatpush1.msra.mxu0 0.0
      %1180 = vmatprep.subr.mxu0 0.0
      %1181 = vmatpush1.msra.mxu0 0.0
      %1182 = vmatprep.subr.mxu0 0.0
      %1183 = vmatpush1.msra.mxu0 0.0
      %1184 = vmatprep.subr.mxu0 0.0
      %1185 = vmatpush1.msra.mxu0 0.0
      %1186 = vmatprep.subr.mxu0 0.0
      %1187 = vmatpush1.msra.mxu0 0.0
      %1188 = vmatprep.subr.mxu0 0.0
      %1189 = vmatpush1.msra.mxu0 0.0
      %1190 = vmatprep.subr.mxu0 0.0
      %1191 = vmatpush1.msra.mxu0 0.0
      %1192 = vmatprep.subr.mxu0 0.0
      %1193 = vmatpush1.msra.mxu0 0.0
      %1194 = vmatprep.subr.mxu0 0.0
      %1195 = vmatpush1.msra.mxu0 0.0
      %1196 = vmatprep.subr.mxu0 0.0
      %1197 = vmatpush1.msra.mxu0 0.0
      %1198 = vmatprep.subr.mxu0 0.0
      %1199 = vmatpush1.msra.mxu0 0.0
      %1200 = vmatprep.subr.mxu0 0.0
      %1201 = vmatpush1.msra.mxu0 0.0
      %1202 = vmatprep.subr.mxu0 0.0
      %1203 = vmatpush1.msra.mxu0 %v1122
      %1204 = vmatprep.subr.mxu0 0.0
      %1205 = vmatpush1.msra.mxu0 %v1121
      %1206 = vmatprep.subr.mxu0 0.0
      %1207 = vmatpush1.msra.mxu0 %v1120
      %1208 = vmatprep.subr.mxu0 0.0
      %1209 = vmatpush1.msra.mxu0 %v1119
      %1210 = vmatprep.subr.mxu0 0.0
      %1211 = vmatpush2.msra.mxu0 0.0
      %1212 = vmatprep.subr.mxu0 0.0
      %1213 = vmatpush2.msra.mxu0 0.0
      %1214 = vmatprep.subr.mxu0 0.0
      %1215 = vmatpush2.msra.mxu0 0.0
      %1216 = vmatprep.subr.mxu0 0.0
      %1217 = vmatpush2.msra.mxu0 0.0
      %1218 = vmatprep.subr.mxu0 0.0
      %1219 = vmatpush2.msra.mxu0 0.0
      %1220 = vmatprep.subr.mxu0 0.0
      %1221 = vmatpush2.msra.mxu0 0.0
      %1222 = vmatprep.subr.mxu0 0.0
      %1223 = vmatpush2.msra.mxu0 0.0
      %1224 = vmatprep.subr.mxu0 0.0
      %1225 = vmatpush2.msra.mxu0 0.0
      %1226 = vmatprep.subr.mxu0 0.0
      %1227 = vmatpush2.msra.mxu0 0.0
      %1228 = vmatprep.subr.mxu0 0.0
      %1229 = vmatpush2.msra.mxu0 0.0
      %1230 = vmatprep.subr.mxu0 0.0
      %1231 = vmatpush2.msra.mxu0 0.0
      %1232 = vmatprep.subr.mxu0 0.0
      %1233 = vmatpush2.msra.mxu0 0.0
      %1234 = vmatprep.subr.mxu0 0.0
      %1235 = vmatpush2.msra.mxu0 0.0
      %1236 = vmatprep.subr.mxu0 0.0
      %1237 = vmatpush2.msra.mxu0 0.0
      %1238 = vmatprep.subr.mxu0 0.0
      %1239 = vmatpush2.msra.mxu0 0.0
      %1240 = vmatprep.subr.mxu0 0.0
      %1241 = vmatpush2.msra.mxu0 0.0
      %1242 = vmatprep.mubr.f32.mxu0 0.0
      %1243 = vmatmul.mubr.f32.gmra.mxu0 %v1131
      %v1244 = vpop.f32.mrf.mxu0
      %v1245 = vadd.f32 %v1128, %v1244
      %v1246 = vpop.f32.mrf.mxu0
      %1247 = vmatprep.mubr.f32.mxu0 0.0
      %1248 = vmatmul.mubr.f32.gmra.mxu0 %v1134
      %v1249 = vpop.f32.mrf.mxu0
      %v1250 = vadd.f32 %v1128, %v1249
      %v1251 = vpop.f32.mrf.mxu0
      %1252 = vmatprep.mubr.f32.mxu0 0.0
      %1253 = vmatmul.mubr.f32.gmra.mxu0 %v1137
      %v1254 = vpop.f32.mrf.mxu0
      %v1255 = vadd.f32 %v1128, %v1254
      %v1256 = vpop.f32.mrf.mxu0
      %1257 = vmatprep.mubr.f32.mxu0 0.0
      %1258 = vmatmul.mubr.f32.gmra.mxu0 %v1140
      %v1259 = vpop.f32.mrf.mxu0
      %v1260 = vadd.f32 %v1128, %v1259
      %v1261 = vpop.f32.mrf.mxu0
      %1262 = vmatprep.mubr.f32.mxu0 0.0
      %1263 = vmatmul.mubr.f32.gmra.mxu0 %v1143
      %v1264 = vpop.f32.mrf.mxu0
      %v1265 = vadd.f32 %v1128, %v1264
      %v1266 = vpop.f32.mrf.mxu0
      %1267 = vmatprep.mubr.f32.mxu0 0.0
      %1268 = vmatmul.mubr.f32.gmra.mxu0 %v1146
      %v1269 = vpop.f32.mrf.mxu0
      %v1270 = vadd.f32 %v1128, %v1269
      %v1271 = vpop.f32.mrf.mxu0
      %1272 = vmatprep.mubr.f32.mxu0 0.0
      %1273 = vmatmul.mubr.f32.gmra.mxu0 %v1149
      %v1274 = vpop.f32.mrf.mxu0
      %v1275 = vadd.f32 %v1128, %v1274
      %v1276 = vpop.f32.mrf.mxu0
      %1277 = vmatprep.mubr.f32.mxu0 0.0
      %1278 = vmatmul.mubr.f32.gmra.mxu0 %v1152
      %v1279 = vpop.f32.mrf.mxu0
      %v1280 = vadd.f32 %v1128, %v1279
      %v1281 = vpop.f32.mrf.mxu0
      %1282 = vmatprep.mubr.f32.mxu0 0.0
      %1283 = vmatmul.mubr.f32.gmra.mxu0 %v1155
      %v1284 = vpop.f32.mrf.mxu0
      %v1285 = vadd.f32 %v1128, %v1284
      %v1286 = vpop.f32.mrf.mxu0
      %1287 = vmatprep.mubr.f32.mxu0 0.0
      %1288 = vmatmul.mubr.f32.gmra.mxu0 %v1158
      %v1289 = vpop.f32.mrf.mxu0
      %v1290 = vadd.f32 %v1128, %v1289
      %v1291 = vpop.f32.mrf.mxu0
      %1292 = vmatprep.mubr.f32.mxu0 0.0
      %1293 = vmatmul.mubr.f32.gmra.mxu0 %v1161
      %v1294 = vpop.f32.mrf.mxu0
      %v1295 = vadd.f32 %v1128, %v1294
      %v1296 = vpop.f32.mrf.mxu0
      %1297 = vmatprep.mubr.f32.mxu0 0.0
      %1298 = vmatmul.mubr.f32.gmra.mxu0 %v1164
      %v1299 = vpop.f32.mrf.mxu0
      %v1300 = vadd.f32 %v1128, %v1299
      %v1301 = vpop.f32.mrf.mxu0
      %1302 = vmatprep.mubr.f32.mxu0 0.0
      %1303 = vmatmul.mubr.f32.gmra.mxu0 %v1167
      %v1304 = vpop.f32.mrf.mxu0
      %v1305 = vadd.f32 %v1128, %v1304
      %v1306 = vpop.f32.mrf.mxu0
      %1307 = vmatprep.mubr.f32.mxu0 0.0
      %1308 = vmatmul.mubr.f32.gmra.mxu0 %v1170
      %v1309 = vpop.f32.mrf.mxu0
      %v1310 = vadd.f32 %v1128, %v1309
      %v1311 = vpop.f32.mrf.mxu0
      %1312 = vmatprep.mubr.f32.mxu0 0.0
      %1313 = vmatmul.mubr.f32.gmra.mxu0 %v1173
      %v1314 = vpop.f32.mrf.mxu0
      %v1315 = vadd.f32 %v1128, %v1314
      %v1316 = vpop.f32.mrf.mxu0
      %1317 = vmatprep.mubr.f32.mxu0 0.0
      %1318 = vmatmul.mubr.f32.gmra.mxu0 %v1176
      %v1319 = vpop.f32.mrf.mxu0
      %v1320 = vadd.f32 %v1128, %v1319
      %v1321 = vpop.f32.mrf.mxu0
      %1322 = vdwg.mxu0
      %v1323 = vtanh.pop %v1041
      %v1324 = vtanh.pop %v1046
      %v1325 = vtanh.pop %v1051
      %v1326 = vtanh.pop %v1056
      %v1327 = vtanh.pop %v1061
      %v1328 = vtanh.pop %v1066
      %v1329 = vtanh.pop %v1071
      %v1330 = vtanh.pop %v1076
      %v1331 = vtanh.pop %v1081
      %v1332 = vtanh.pop %v1086
      %v1333 = vtanh.pop %v1091
      %v1334 = vtanh.pop %v1096
      %v1335 = vtanh.pop %v1101
      %v1336 = vtanh.pop %v1106
      %v1337 = vtanh.pop %v1111
      %v1338 = vtanh.pop %v1116
      %v1339 = vmul.f32 %v1245, 0.5
      %v1340 = vmul.f32 %v1250, 0.5
      %v1341 = vmul.f32 %v1255, 0.5
      %v1342 = vmul.f32 %v1260, 0.5
      %v1343 = vmul.f32 %v1265, 0.5
      %v1344 = vmul.f32 %v1270, 0.5
      %v1345 = vmul.f32 %v1275, 0.5
      %v1346 = vmul.f32 %v1280, 0.5
      %v1347 = vmul.f32 %v1285, 0.5
      %v1348 = vmul.f32 %v1290, 0.5
      %v1349 = vmul.f32 %v1295, 0.5
      %v1350 = vmul.f32 %v1300, 0.5
      %v1351 = vmul.f32 %v1305, 0.5
      %v1352 = vmul.f32 %v1310, 0.5
      %v1353 = vmul.f32 %v1315, 0.5
      %v1354 = vmul.f32 %v1320, 0.5
      %v1355 = vmax.f32 %v1245, %v1339
      %v1356 = vmax.f32 %v1250, %v1340
      %v1357 = vmax.f32 %v1255, %v1341
      %v1358 = vmax.f32 %v1260, %v1342
      %v1359 = vmax.f32 %v1265, %v1343
      %v1360 = vmax.f32 %v1270, %v1344
      %v1361 = vmax.f32 %v1275, %v1345
      %v1362 = vmax.f32 %v1280, %v1346
      %v1363 = vmax.f32 %v1285, %v1347
      %v1364 = vmax.f32 %v1290, %v1348
      %v1365 = vmax.f32 %v1295, %v1349
      %v1366 = vmax.f32 %v1300, %v1350
      %v1367 = vmax.f32 %v1305, %v1351
      %v1368 = vmax.f32 %v1310, %v1352
      %v1369 = vmax.f32 %v1315, %v1353
      %v1370 = vmax.f32 %v1320, %v1354
      %v1371 = vld [vmem:[%s10] sm:$0xff]
      %v1372 = vld [vmem:[%s10 + $0x8] sm:$0xff]
      %v1373 = vld [vmem:[%s10 + $0x10] sm:$0xff]
      %v1374 = vld [vmem:[%s10 + $0x18] sm:$0xff]
      %v1375 = vld [vmem:[%s10 + $0x20] sm:$0xff]
      %v1376 = vld [vmem:[%s10 + $0x28] sm:$0xff]
      %v1377 = vld [vmem:[%s10 + $0x30] sm:$0xff]
      %v1378 = vld [vmem:[%s10 + $0x38] sm:$0xff]
      %v1379 = vld [vmem:[%s11] sm:$0x1]
      %v1381 = vlaneseq
      %v1382 = vshrl.u32 %v1381, 7
      %v1383 = vsub.s32 0, %v1382
      %v1384 = vrot.slane %v1379, %v1383
      %vm1386 = vcmask 523264
      %v1388 = vsel %vm1386, %v1323, 0
      %v1391 = vsel %vm1386, %v1324, 0
      %v1394 = vsel %vm1386, %v1325, 0
      %v1397 = vsel %vm1386, %v1326, 0
      %v1400 = vsel %vm1386, %v1327, 0
      %v1403 = vsel %vm1386, %v1328, 0
      %v1406 = vsel %vm1386, %v1329, 0
      %v1409 = vsel %vm1386, %v1330, 0
      %v1412 = vsel %vm1386, %v1331, 0
      %v1415 = vsel %vm1386, %v1332, 0
      %v1418 = vsel %vm1386, %v1333, 0
      %v1421 = vsel %vm1386, %v1334, 0
      %v1424 = vsel %vm1386, %v1335, 0
      %v1427 = vsel %vm1386, %v1336, 0
      %v1430 = vsel %vm1386, %v1337, 0
      %v1433 = vsel %vm1386, %v1338, 0
      %1435 = vmatprep.subr.mxu0 0.0
      %1436 = vmatpush1.msra.mxu0 0.0
      %1437 = vmatprep.subr.mxu0 0.0
      %1438 = vmatpush1.msra.mxu0 0.0
      %1439 = vmatprep.subr.mxu0 0.0
      %1440 = vmatpush1.msra.mxu0 0.0
      %1441 = vmatprep.subr.mxu0 0.0
      %1442 = vmatpush1.msra.mxu0 0.0
      %1443 = vmatprep.subr.mxu0 0.0
      %1444 = vmatpush1.msra.mxu0 0.0
      %1445 = vmatprep.subr.mxu0 0.0
      %1446 = vmatpush1.msra.mxu0 0.0
      %1447 = vmatprep.subr.mxu0 0.0
      %1448 = vmatpush1.msra.mxu0 0.0
      %1449 = vmatprep.subr.mxu0 0.0
      %1450 = vmatpush1.msra.mxu0 0.0
      %1451 = vmatprep.subr.mxu0 0.0
      %1452 = vmatpush1.msra.mxu0 %v1378
      %1453 = vmatprep.subr.mxu0 0.0
      %1454 = vmatpush1.msra.mxu0 %v1377
      %1455 = vmatprep.subr.mxu0 0.0
      %1456 = vmatpush1.msra.mxu0 %v1376
      %1457 = vmatprep.subr.mxu0 0.0
      %1458 = vmatpush1.msra.mxu0 %v1375
      %1459 = vmatprep.subr.mxu0 0.0
      %1460 = vmatpush1.msra.mxu0 %v1374
      %1461 = vmatprep.subr.mxu0 0.0
      %1462 = vmatpush1.msra.mxu0 %v1373
      %1463 = vmatprep.subr.mxu0 0.0
      %1464 = vmatpush1.msra.mxu0 %v1372
      %1465 = vmatprep.subr.mxu0 0.0
      %1466 = vmatpush1.msra.mxu0 %v1371
      %1467 = vmatprep.subr.mxu0 0.0
      %1468 = vmatpush2.msra.mxu0 0.0
      %1469 = vmatprep.subr.mxu0 0.0
      %1470 = vmatpush2.msra.mxu0 0.0
      %1471 = vmatprep.subr.mxu0 0.0
      %1472 = vmatpush2.msra.mxu0 0.0
      %1473 = vmatprep.subr.mxu0 0.0
      %1474 = vmatpush2.msra.mxu0 0.0
      %1475 = vmatprep.subr.mxu0 0.0
      %1476 = vmatpush2.msra.mxu0 0.0
      %1477 = vmatprep.subr.mxu0 0.0
      %1478 = vmatpush2.msra.mxu0 0.0
      %1479 = vmatprep.subr.mxu0 0.0
      %1480 = vmatpush2.msra.mxu0 0.0
      %1481 = vmatprep.subr.mxu0 0.0
      %1482 = vmatpush2.msra.mxu0 0.0
      %1483 = vmatprep.subr.mxu0 0.0
      %1484 = vmatpush2.msra.mxu0 0.0
      %1485 = vmatprep.subr.mxu0 0.0
      %1486 = vmatpush2.msra.mxu0 0.0
      %1487 = vmatprep.subr.mxu0 0.0
      %1488 = vmatpush2.msra.mxu0 0.0
      %1489 = vmatprep.subr.mxu0 0.0
      %1490 = vmatpush2.msra.mxu0 0.0
      %1491 = vmatprep.subr.mxu0 0.0
      %1492 = vmatpush2.msra.mxu0 0.0
      %1493 = vmatprep.subr.mxu0 0.0
      %1494 = vmatpush2.msra.mxu0 0.0
      %1495 = vmatprep.subr.mxu0 0.0
      %1496 = vmatpush2.msra.mxu0 0.0
      %1497 = vmatprep.subr.mxu0 0.0
      %1498 = vmatpush2.msra.mxu0 0.0
      %1499 = vmatprep.mubr.f32.mxu0 0.0
      %1500 = vmatmul.mubr.f32.gmra.mxu0 %v1388
      %v1501 = vpop.f32.mrf.mxu0
      %v1502 = vadd.f32 %v1384, %v1501
      %v1503 = vpop.f32.mrf.mxu0
      %1504 = vmatprep.mubr.f32.mxu0 0.0
      %1505 = vmatmul.mubr.f32.gmra.mxu0 %v1391
      %v1506 = vpop.f32.mrf.mxu0
      %v1507 = vadd.f32 %v1384, %v1506
      %v1508 = vpop.f32.mrf.mxu0
      %1509 = vmatprep.mubr.f32.mxu0 0.0
      %1510 = vmatmul.mubr.f32.gmra.mxu0 %v1394
      %v1511 = vpop.f32.mrf.mxu0
      %v1512 = vadd.f32 %v1384, %v1511
      %v1513 = vpop.f32.mrf.mxu0
      %1514 = vmatprep.mubr.f32.mxu0 0.0
      %1515 = vmatmul.mubr.f32.gmra.mxu0 %v1397
      %v1516 = vpop.f32.mrf.mxu0
      %v1517 = vadd.f32 %v1384, %v1516
      %v1518 = vpop.f32.mrf.mxu0
      %1519 = vmatprep.mubr.f32.mxu0 0.0
      %1520 = vmatmul.mubr.f32.gmra.mxu0 %v1400
      %v1521 = vpop.f32.mrf.mxu0
      %v1522 = vadd.f32 %v1384, %v1521
      %v1523 = vpop.f32.mrf.mxu0
      %1524 = vmatprep.mubr.f32.mxu0 0.0
      %1525 = vmatmul.mubr.f32.gmra.mxu0 %v1403
      %v1526 = vpop.f32.mrf.mxu0
      %v1527 = vadd.f32 %v1384, %v1526
      %v1528 = vpop.f32.mrf.mxu0
      %1529 = vmatprep.mubr.f32.mxu0 0.0
      %1530 = vmatmul.mubr.f32.gmra.mxu0 %v1406
      %v1531 = vpop.f32.mrf.mxu0
      %v1532 = vadd.f32 %v1384, %v1531
      %v1533 = vpop.f32.mrf.mxu0
      %1534 = vmatprep.mubr.f32.mxu0 0.0
      %1535 = vmatmul.mubr.f32.gmra.mxu0 %v1409
      %v1536 = vpop.f32.mrf.mxu0
      %v1537 = vadd.f32 %v1384, %v1536
      %v1538 = vpop.f32.mrf.mxu0
      %1539 = vmatprep.mubr.f32.mxu0 0.0
      %1540 = vmatmul.mubr.f32.gmra.mxu0 %v1412
      %v1541 = vpop.f32.mrf.mxu0
      %v1542 = vadd.f32 %v1384, %v1541
      %v1543 = vpop.f32.mrf.mxu0
      %1544 = vmatprep.mubr.f32.mxu0 0.0
      %1545 = vmatmul.mubr.f32.gmra.mxu0 %v1415
      %v1546 = vpop.f32.mrf.mxu0
      %v1547 = vadd.f32 %v1384, %v1546
      %v1548 = vpop.f32.mrf.mxu0
      %1549 = vmatprep.mubr.f32.mxu0 0.0
      %1550 = vmatmul.mubr.f32.gmra.mxu0 %v1418
      %v1551 = vpop.f32.mrf.mxu0
      %v1552 = vadd.f32 %v1384, %v1551
      %v1553 = vpop.f32.mrf.mxu0
      %1554 = vmatprep.mubr.f32.mxu0 0.0
      %1555 = vmatmul.mubr.f32.gmra.mxu0 %v1421
      %v1556 = vpop.f32.mrf.mxu0
      %v1557 = vadd.f32 %v1384, %v1556
      %v1558 = vpop.f32.mrf.mxu0
      %1559 = vmatprep.mubr.f32.mxu0 0.0
      %1560 = vmatmul.mubr.f32.gmra.mxu0 %v1424
      %v1561 = vpop.f32.mrf.mxu0
      %v1562 = vadd.f32 %v1384, %v1561
      %v1563 = vpop.f32.mrf.mxu0
      %1564 = vmatprep.mubr.f32.mxu0 0.0
      %1565 = vmatmul.mubr.f32.gmra.mxu0 %v1427
      %v1566 = vpop.f32.mrf.mxu0
      %v1567 = vadd.f32 %v1384, %v1566
      %v1568 = vpop.f32.mrf.mxu0
      %1569 = vmatprep.mubr.f32.mxu0 0.0
      %1570 = vmatmul.mubr.f32.gmra.mxu0 %v1430
      %v1571 = vpop.f32.mrf.mxu0
      %v1572 = vadd.f32 %v1384, %v1571
      %v1573 = vpop.f32.mrf.mxu0
      %1574 = vmatprep.mubr.f32.mxu0 0.0
      %1575 = vmatmul.mubr.f32.gmra.mxu0 %v1433
      %v1576 = vpop.f32.mrf.mxu0
      %v1577 = vadd.f32 %v1384, %v1576
      %v1578 = vpop.f32.mrf.mxu0
      %1579 = vdwg.mxu0
      %v1580 = vld [vmem:[%s12] sm:$0xff]
      %v1581 = vld [vmem:[%s12 + $0x8] sm:$0xff]
      %v1582 = vld [vmem:[%s12 + $0x10] sm:$0xff]
      %v1583 = vld [vmem:[%s12 + $0x18] sm:$0xff]
      %v1584 = vld [vmem:[%s12 + $0x20] sm:$0xff]
      %v1585 = vld [vmem:[%s12 + $0x28] sm:$0xff]
      %v1586 = vld [vmem:[%s12 + $0x30] sm:$0xff]
      %v1587 = vld [vmem:[%s12 + $0x38] sm:$0xff]
      %v1588 = vld [vmem:[%s13] sm:$0x1]
      %v1590 = vlaneseq
      %v1591 = vshrl.u32 %v1590, 7
      %v1592 = vsub.s32 0, %v1591
      %v1593 = vrot.slane %v1588, %v1592
      %v1596 = vsel %vm1386, %v1355, 0
      %v1599 = vsel %vm1386, %v1356, 0
      %v1602 = vsel %vm1386, %v1357, 0
      %v1605 = vsel %vm1386, %v1358, 0
      %v1608 = vsel %vm1386, %v1359, 0
      %v1611 = vsel %vm1386, %v1360, 0
      %v1614 = vsel %vm1386, %v1361, 0
      %v1617 = vsel %vm1386, %v1362, 0
      %v1620 = vsel %vm1386, %v1363, 0
      %v1623 = vsel %vm1386, %v1364, 0
      %v1626 = vsel %vm1386, %v1365, 0
      %v1629 = vsel %vm1386, %v1366, 0
      %v1632 = vsel %vm1386, %v1367, 0
      %v1635 = vsel %vm1386, %v1368, 0
      %v1638 = vsel %vm1386, %v1369, 0
      %v1641 = vsel %vm1386, %v1370, 0
      %1643 = vmatprep.subr.mxu0 0.0
      %1644 = vmatpush1.msra.mxu0 0.0
      %1645 = vmatprep.subr.mxu0 0.0
      %1646 = vmatpush1.msra.mxu0 0.0
      %1647 = vmatprep.subr.mxu0 0.0
      %1648 = vmatpush1.msra.mxu0 0.0
      %1649 = vmatprep.subr.mxu0 0.0
      %1650 = vmatpush1.msra.mxu0 0.0
      %1651 = vmatprep.subr.mxu0 0.0
      %1652 = vmatpush1.msra.mxu0 0.0
      %1653 = vmatprep.subr.mxu0 0.0
      %1654 = vmatpush1.msra.mxu0 0.0
      %1655 = vmatprep.subr.mxu0 0.0
      %1656 = vmatpush1.msra.mxu0 0.0
      %1657 = vmatprep.subr.mxu0 0.0
      %1658 = vmatpush1.msra.mxu0 0.0
      %1659 = vmatprep.subr.mxu0 0.0
      %1660 = vmatpush1.msra.mxu0 %v1587
      %1661 = vmatprep.subr.mxu0 0.0
      %1662 = vmatpush1.msra.mxu0 %v1586
      %1663 = vmatprep.subr.mxu0 0.0
      %1664 = vmatpush1.msra.mxu0 %v1585
      %1665 = vmatprep.subr.mxu0 0.0
      %1666 = vmatpush1.msra.mxu0 %v1584
      %1667 = vmatprep.subr.mxu0 0.0
      %1668 = vmatpush1.msra.mxu0 %v1583
      %1669 = vmatprep.subr.mxu0 0.0
      %1670 = vmatpush1.msra.mxu0 %v1582
      %1671 = vmatprep.subr.mxu0 0.0
      %1672 = vmatpush1.msra.mxu0 %v1581
      %1673 = vmatprep.subr.mxu0 0.0
      %1674 = vmatpush1.msra.mxu0 %v1580
      %1675 = vmatprep.subr.mxu0 0.0
      %1676 = vmatpush2.msra.mxu0 0.0
      %1677 = vmatprep.subr.mxu0 0.0
      %1678 = vmatpush2.msra.mxu0 0.0
      %1679 = vmatprep.subr.mxu0 0.0
      %1680 = vmatpush2.msra.mxu0 0.0
      %1681 = vmatprep.subr.mxu0 0.0
      %1682 = vmatpush2.msra.mxu0 0.0
      %1683 = vmatprep.subr.mxu0 0.0
      %1684 = vmatpush2.msra.mxu0 0.0
      %1685 = vmatprep.subr.mxu0 0.0
      %1686 = vmatpush2.msra.mxu0 0.0
      %1687 = vmatprep.subr.mxu0 0.0
      %1688 = vmatpush2.msra.mxu0 0.0
      %1689 = vmatprep.subr.mxu0 0.0
      %1690 = vmatpush2.msra.mxu0 0.0
      %1691 = vmatprep.subr.mxu0 0.0
      %1692 = vmatpush2.msra.mxu0 0.0
      %1693 = vmatprep.subr.mxu0 0.0
      %1694 = vmatpush2.msra.mxu0 0.0
      %1695 = vmatprep.subr.mxu0 0.0
      %1696 = vmatpush2.msra.mxu0 0.0
      %1697 = vmatprep.subr.mxu0 0.0
      %1698 = vmatpush2.msra.mxu0 0.0
      %1699 = vmatprep.subr.mxu0 0.0
      %1700 = vmatpush2.msra.mxu0 0.0
      %1701 = vmatprep.subr.mxu0 0.0
      %1702 = vmatpush2.msra.mxu0 0.0
      %1703 = vmatprep.subr.mxu0 0.0
      %1704 = vmatpush2.msra.mxu0 0.0
      %1705 = vmatprep.subr.mxu0 0.0
      %1706 = vmatpush2.msra.mxu0 0.0
      %1707 = vmatprep.mubr.f32.mxu0 0.0
      %1708 = vmatmul.mubr.f32.gmra.mxu0 %v1596
      %v1709 = vpop.f32.mrf.mxu0
      %v1710 = vadd.f32 %v1593, %v1709
      %v1711 = vpop.f32.mrf.mxu0
      %1712 = vmatprep.mubr.f32.mxu0 0.0
      %1713 = vmatmul.mubr.f32.gmra.mxu0 %v1599
      %v1714 = vpop.f32.mrf.mxu0
      %v1715 = vadd.f32 %v1593, %v1714
      %v1716 = vpop.f32.mrf.mxu0
      %1717 = vmatprep.mubr.f32.mxu0 0.0
      %1718 = vmatmul.mubr.f32.gmra.mxu0 %v1602
      %v1719 = vpop.f32.mrf.mxu0
      %v1720 = vadd.f32 %v1593, %v1719
      %v1721 = vpop.f32.mrf.mxu0
      %1722 = vmatprep.mubr.f32.mxu0 0.0
      %1723 = vmatmul.mubr.f32.gmra.mxu0 %v1605
      %v1724 = vpop.f32.mrf.mxu0
      %v1725 = vadd.f32 %v1593, %v1724
      %v1726 = vpop.f32.mrf.mxu0
      %1727 = vmatprep.mubr.f32.mxu0 0.0
      %1728 = vmatmul.mubr.f32.gmra.mxu0 %v1608
      %v1729 = vpop.f32.mrf.mxu0
      %v1730 = vadd.f32 %v1593, %v1729
      %v1731 = vpop.f32.mrf.mxu0
      %1732 = vmatprep.mubr.f32.mxu0 0.0
      %1733 = vmatmul.mubr.f32.gmra.mxu0 %v1611
      %v1734 = vpop.f32.mrf.mxu0
      %v1735 = vadd.f32 %v1593, %v1734
      %v1736 = vpop.f32.mrf.mxu0
      %1737 = vmatprep.mubr.f32.mxu0 0.0
      %1738 = vmatmul.mubr.f32.gmra.mxu0 %v1614
      %v1739 = vpop.f32.mrf.mxu0
      %v1740 = vadd.f32 %v1593, %v1739
      %v1741 = vpop.f32.mrf.mxu0
      %1742 = vmatprep.mubr.f32.mxu0 0.0
      %1743 = vmatmul.mubr.f32.gmra.mxu0 %v1617
      %v1744 = vpop.f32.mrf.mxu0
      %v1745 = vadd.f32 %v1593, %v1744
      %v1746 = vpop.f32.mrf.mxu0
      %1747 = vmatprep.mubr.f32.mxu0 0.0
      %1748 = vmatmul.mubr.f32.gmra.mxu0 %v1620
      %v1749 = vpop.f32.mrf.mxu0
      %v1750 = vadd.f32 %v1593, %v1749
      %v1751 = vpop.f32.mrf.mxu0
      %1752 = vmatprep.mubr.f32.mxu0 0.0
      %1753 = vmatmul.mubr.f32.gmra.mxu0 %v1623
      %v1754 = vpop.f32.mrf.mxu0
      %v1755 = vadd.f32 %v1593, %v1754
      %v1756 = vpop.f32.mrf.mxu0
      %1757 = vmatprep.mubr.f32.mxu0 0.0
      %1758 = vmatmul.mubr.f32.gmra.mxu0 %v1626
      %v1759 = vpop.f32.mrf.mxu0
      %v1760 = vadd.f32 %v1593, %v1759
      %v1761 = vpop.f32.mrf.mxu0
      %1762 = vmatprep.mubr.f32.mxu0 0.0
      %1763 = vmatmul.mubr.f32.gmra.mxu0 %v1629
      %v1764 = vpop.f32.mrf.mxu0
      %v1765 = vadd.f32 %v1593, %v1764
      %v1766 = vpop.f32.mrf.mxu0
      %1767 = vmatprep.mubr.f32.mxu0 0.0
      %1768 = vmatmul.mubr.f32.gmra.mxu0 %v1632
      %v1769 = vpop.f32.mrf.mxu0
      %v1770 = vadd.f32 %v1593, %v1769
      %v1771 = vpop.f32.mrf.mxu0
      %1772 = vmatprep.mubr.f32.mxu0 0.0
      %1773 = vmatmul.mubr.f32.gmra.mxu0 %v1635
      %v1774 = vpop.f32.mrf.mxu0
      %v1775 = vadd.f32 %v1593, %v1774
      %v1776 = vpop.f32.mrf.mxu0
      %1777 = vmatprep.mubr.f32.mxu0 0.0
      %1778 = vmatmul.mubr.f32.gmra.mxu0 %v1638
      %v1779 = vpop.f32.mrf.mxu0
      %v1780 = vadd.f32 %v1593, %v1779
      %v1781 = vpop.f32.mrf.mxu0
      %1782 = vmatprep.mubr.f32.mxu0 0.0
      %1783 = vmatmul.mubr.f32.gmra.mxu0 %v1641
      %v1784 = vpop.f32.mrf.mxu0
      %v1785 = vadd.f32 %v1593, %v1784
      %v1786 = vpop.f32.mrf.mxu0
      %1787 = vdwg.mxu0
      %v1788 = vtanh.pop %v1710
      %v1789 = vtanh.pop %v1715
      %v1790 = vtanh.pop %v1720
      %v1791 = vtanh.pop %v1725
      %v1792 = vtanh.pop %v1730
      %v1793 = vtanh.pop %v1735
      %v1794 = vtanh.pop %v1740
      %v1795 = vtanh.pop %v1745
      %v1796 = vtanh.pop %v1750
      %v1797 = vtanh.pop %v1755
      %v1798 = vtanh.pop %v1760
      %v1799 = vtanh.pop %v1765
      %v1800 = vtanh.pop %v1770
      %v1801 = vtanh.pop %v1775
      %v1802 = vtanh.pop %v1780
      %v1803 = vtanh.pop %v1785
      %v1804 = vld [vmem:[%s485] sm:$0xff]
      %v1805 = vld [vmem:[%s485 + $0x8] sm:$0xff]
      %v1806 = vld [vmem:[%s485 + $0x10] sm:$0xff]
      %v1807 = vld [vmem:[%s485 + $0x18] sm:$0xff]
      %v1808 = vld [vmem:[%s485 + $0x20] sm:$0xff]
      %v1809 = vld [vmem:[%s485 + $0x28] sm:$0xff]
      %v1810 = vld [vmem:[%s485 + $0x30] sm:$0xff]
      %v1811 = vld [vmem:[%s485 + $0x38] sm:$0xff]
      %v1812 = vld [vmem:[%s485 + $0x40] sm:$0xff]
      %v1813 = vld [vmem:[%s485 + $0x48] sm:$0xff]
      %v1814 = vld [vmem:[%s485 + $0x50] sm:$0xff]
      %v1815 = vld [vmem:[%s485 + $0x58] sm:$0xff]
      %v1816 = vld [vmem:[%s485 + $0x60] sm:$0xff]
      %v1817 = vld [vmem:[%s485 + $0x68] sm:$0xff]
      %v1818 = vld [vmem:[%s485 + $0x70] sm:$0xff]
      %v1819 = vld [vmem:[%s485 + $0x78] sm:$0xff]
      %v1820 = vmul.f32 %v1502, 1.442695
      %v1821 = vpow.pop %v1820
      %v1822 = vmul.f32 %v1507, 1.442695
      %v1823 = vpow.pop %v1822
      %v1824 = vmul.f32 %v1512, 1.442695
      %v1825 = vpow.pop %v1824
      %v1826 = vmul.f32 %v1517, 1.442695
      %v1827 = vpow.pop %v1826
      %v1828 = vmul.f32 %v1522, 1.442695
      %v1829 = vpow.pop %v1828
      %v1830 = vmul.f32 %v1527, 1.442695
      %v1831 = vpow.pop %v1830
      %v1832 = vmul.f32 %v1532, 1.442695
      %v1833 = vpow.pop %v1832
      %v1834 = vmul.f32 %v1537, 1.442695
      %v1835 = vpow.pop %v1834
      %v1836 = vmul.f32 %v1542, 1.442695
      %v1837 = vpow.pop %v1836
      %v1838 = vmul.f32 %v1547, 1.442695
      %v1839 = vpow.pop %v1838
      %v1840 = vmul.f32 %v1552, 1.442695
      %v1841 = vpow.pop %v1840
      %v1842 = vmul.f32 %v1557, 1.442695
      %v1843 = vpow.pop %v1842
      %v1844 = vmul.f32 %v1562, 1.442695
      %v1845 = vpow.pop %v1844
      %v1846 = vmul.f32 %v1567, 1.442695
      %v1847 = vpow.pop %v1846
      %v1848 = vmul.f32 %v1572, 1.442695
      %v1849 = vpow.pop %v1848
      %v1850 = vmul.f32 %v1577, 1.442695
      %v1851 = vpow.pop %v1850
      %v1852 = vmul.f32 %v1804, %v1821
      %v1853 = vmul.f32 %v1805, %v1823
      %v1854 = vmul.f32 %v1806, %v1825
      %v1855 = vmul.f32 %v1807, %v1827
      %v1856 = vmul.f32 %v1808, %v1829
      %v1857 = vmul.f32 %v1809, %v1831
      %v1858 = vmul.f32 %v1810, %v1833
      %v1859 = vmul.f32 %v1811, %v1835
      %v1860 = vmul.f32 %v1812, %v1837
      %v1861 = vmul.f32 %v1813, %v1839
      %v1862 = vmul.f32 %v1814, %v1841
      %v1863 = vmul.f32 %v1815, %v1843
      %v1864 = vmul.f32 %v1816, %v1845
      %v1865 = vmul.f32 %v1817, %v1847
      %v1866 = vmul.f32 %v1818, %v1849
      %v1867 = vmul.f32 %v1819, %v1851
      %v1868 = vadd.f32 %v1852, %v1788
      %v1869 = vadd.f32 %v1853, %v1789
      %v1870 = vadd.f32 %v1854, %v1790
      %v1871 = vadd.f32 %v1855, %v1791
      %v1872 = vadd.f32 %v1856, %v1792
      %v1873 = vadd.f32 %v1857, %v1793
      %v1874 = vadd.f32 %v1858, %v1794
      %v1875 = vadd.f32 %v1859, %v1795
      %v1876 = vadd.f32 %v1860, %v1796
      %v1877 = vadd.f32 %v1861, %v1797
      %v1878 = vadd.f32 %v1862, %v1798
      %v1879 = vadd.f32 %v1863, %v1799
      %v1880 = vadd.f32 %v1864, %v1800
      %v1881 = vadd.f32 %v1865, %v1801
      %v1882 = vadd.f32 %v1866, %v1802
      %v1883 = vadd.f32 %v1867, %v1803
      %1884 = vst.msk [vmem:[%s491] sm:$0xff] %vm518, %v1868
      %1885 = vst.msk [vmem:[%s491 + $0x8] sm:$0xff] %vm518, %v1869
      %1886 = vst.msk [vmem:[%s491 + $0x10] sm:$0xff] %vm518, %v1870
      %1887 = vst.msk [vmem:[%s491 + $0x18] sm:$0xff] %vm518, %v1871
      %1888 = vst.msk [vmem:[%s491 + $0x20] sm:$0xff] %vm518, %v1872
      %1889 = vst.msk [vmem:[%s491 + $0x28] sm:$0xff] %vm518, %v1873
      %1890 = vst.msk [vmem:[%s491 + $0x30] sm:$0xff] %vm518, %v1874
      %1891 = vst.msk [vmem:[%s491 + $0x38] sm:$0xff] %vm518, %v1875
      %1892 = vst.msk [vmem:[%s491 + $0x40] sm:$0xff] %vm518, %v1876
      %1893 = vst.msk [vmem:[%s491 + $0x48] sm:$0xff] %vm518, %v1877
      %1894 = vst.msk [vmem:[%s491 + $0x50] sm:$0xff] %vm518, %v1878
      %1895 = vst.msk [vmem:[%s491 + $0x58] sm:$0xff] %vm518, %v1879
      %1896 = vst.msk [vmem:[%s491 + $0x60] sm:$0xff] %vm518, %v1880
      %1897 = vst.msk [vmem:[%s491 + $0x68] sm:$0xff] %vm518, %v1881
      %1898 = vst.msk [vmem:[%s491 + $0x70] sm:$0xff] %vm518, %v1882
      %1899 = vst.msk [vmem:[%s491 + $0x78] sm:$0xff] %vm518, %v1883
      %s1900 = smul.u32 16, %s25
      %p1901 = scmp.lt.s32.totalorder %s1900, 31
      %s1902 = scalar_select %p1901, %s1900, 31
      %s1903 = smul.addr %s1902, 8
      %s1904 = scalar_lea.vmem %s14, %s1903
      // Predicated region
      $region77: #{tpu_custom_call.1} parent=75 // pred_check
        %p1905 = pneg %p347
      $region78: #{tpu_custom_call.1} parent=75 // pred_check_branch
        %1907 = sbr.rel (%p1905) target = $region80
      $region79: #{tpu_custom_call.1} parent=75 // pred_region
        %s1908 = smul.u32 16, %s25
      $region80: #{tpu_custom_call.1} parent=75 // pred_fallthru
        _
    $region76: #{tpu_custom_call.1} parent=5 // pred_fallthru
      _
    %p1909 = scmp.le.s32.totalorder 2, %s20
    // Predicated region
    $region81: #{tpu_custom_call.1} parent=5 // pred_check
      %p1910 = pneg %p1909
    $region82: #{tpu_custom_call.1} parent=5 // pred_check_branch
      %1912 = sbr.rel (%p1910) target = $region84
    $region83: #{tpu_custom_call.1} parent=5 // pred_region
      %s1913 = ssub.s32 %s20, 2
      // Predicated region
      $region85: #{tpu_custom_call.1} parent=83 // pred_check
        %p1914 = pneg %p353
      $region86: #{tpu_custom_call.1} parent=83 // pred_check_branch
        %1916 = sbr.rel (%p1914) target = $region88
      $region87: #{tpu_custom_call.1} parent=83 // pred_region
        %s1917 = smul.u32 16, %s26
        %p1918 = scmp.lt.s32.totalorder %s1917, 31
        %s1919 = scalar_select %p1918, %s1917, 31
        %s1920 = smul.addr %s1919, 8
        %s1921 = scalar_lea.vmem %s14, %s1920
      $region88: #{tpu_custom_call.1} parent=83 // pred_fallthru
        _
    $region84: #{tpu_custom_call.1} parent=5 // pred_fallthru
      _
  $region6: #{tpu_custom_call.1} parent=0 // loop_footer
    %s24 = sadd.s32 1, %s20
  $region7: #{tpu_custom_call.1} parent=0 // loop_footer_branch
    %19 = sbr.rel target = $region3
  $region8: #{tpu_custom_call.1} parent=0 // loop_exit
    _

</llo_original>
